<compile_context>
chip_gen: v7x
topology: tpu7x:2x2x1
jax: 0.10.0
libtpu: 0.0.40
codegen_flags: <defaults>
</compile_context>

<pallas_src>
import functools

import jax
import jax.numpy as jnp
from jax import lax
from jax.experimental import pallas as pl
from jax.experimental.pallas import tpu as pltpu


def _softmax_lastdim(z):
    z = z - jnp.max(z, axis=-1, keepdims=True)
    e = jnp.exp(z)
    # EUP reciprocal instead of a VALU divide.
    return e * pl.reciprocal(jnp.sum(e, axis=-1, keepdims=True), approx=True)


def _squash_lastdim(s):
    sq = jnp.sum(s * s, axis=-1, keepdims=True)
    # s * (sq / (1 + sq)) / sqrt(sq + eps), with divide -> EUP reciprocal / rsqrt.
    return s * sq * pl.reciprocal(1.0 + sq, approx=True) * lax.rsqrt(sq + 1e-9)


def _caps_layer_kernel(x_ref, w_ref, b_ref, v_ref, u_ref, *, n_iterations):
    """Fused prediction matmul + agreement routing for one batch tile.

    x_ref: (TB, N, D_in)    caps_output tile
    w_ref: (D_in, D_pad)    weights, zero-padded to a lane-dense output dim
    b_ref: (1, N)           routing logit parameter (shared across batch)
    v_ref: (TB, D_pad)      routed output capsule vector (lane-dense)
    u_ref: (TB, N, D_pad)   VMEM scratch holding u_predict
    """
    TB, N, D_in = x_ref.shape
    D_pad = w_ref.shape[1]

    x = x_ref[...].astype(jnp.float32)
    w = w_ref[...].astype(jnp.float32)

    # u_predict: single (TB*N, D_in) x (D_in, D_pad) MXU matmul, kept in VMEM scratch.
    u_ref[...] = jnp.dot(
        x.reshape(TB * N, D_in), w, preferred_element_type=jnp.float32
    ).reshape(TB, N, D_pad)

    # Initial logits are identical across the batch: softmax once on the (1, 1, N)
    # parameter row, then broadcast (avoids TB redundant exp / lane reductions).
    b_row = b_ref[...].astype(jnp.float32).reshape(1, 1, N)
    b = jnp.broadcast_to(b_row, (TB, 1, N))
    c = jnp.broadcast_to(_softmax_lastdim(b_row), (TB, 1, N))

    u = u_ref[...]
    # s_b = sum_n c_{bn} u_{bnd}: batched (1,N)x(N,D) matmul on the MXU.
    s = jnp.einsum("bqn,bnd->bqd", c, u, preferred_element_type=jnp.float32)
    v = _squash_lastdim(s)

    # n_iterations is a compile-time constant -> static unroll so the LLO scheduler
    # can interleave MXU / EUP / VPU work across routing iterations.
    for _ in range(n_iterations):
        u = u_ref[...]
        # agreement_{bn} = sum_d u_{bnd} v_{bd}: batched matmul on the MXU.
        b = b + jnp.einsum("bqd,bnd->bqn", v, u, preferred_element_type=jnp.float32)
        c = _softmax_lastdim(b)
        s = jnp.einsum("bqn,bnd->bqd", c, u, preferred_element_type=jnp.float32)
        v = _squash_lastdim(s)

    v_ref[...] = v.reshape(TB, D_pad).astype(v_ref.dtype)


def _pick_batch_tile(B, max_tile=128):
    # Largest tile <= max_tile that divides B and satisfies the (8, 128) block rule
    # on the (TB, D_pad) output block (TB % 8 == 0, or TB == B for small batches).
    if B <= max_tile:
        return B
    for tb in range(max_tile, 7, -8):
        if B % tb == 0:
            return tb
    return B


def caps_layer_forward(caps_output, weights, b_logits, n_iterations=3):
    B, N, D_in = caps_output.shape
    D_out = weights.shape[1]

    # Lane-dense output: pad the output feature dim to a multiple of 128.  Zero weight
    # columns are exact no-ops through matmul / squash / agreement; slice after.
    D_pad = pl.cdiv(D_out, 128) * 128
    if D_pad != D_out:
        weights = jnp.pad(weights, ((0, 0), (0, D_pad - D_out)))

    TB = _pick_batch_tile(B)
    grid = (B // TB,)

    kernel = functools.partial(_caps_layer_kernel, n_iterations=n_iterations)
    out = pl.pallas_call(
        kernel,
        grid=grid,
        in_specs=[
            pl.BlockSpec((TB, N, D_in), lambda i: (i, 0, 0)),   # batch-tiled activations
            pl.BlockSpec((D_in, D_pad), lambda i: (0, 0)),      # weights stay resident
            pl.BlockSpec((1, N), lambda i: (0, 0)),             # shared routing logits
        ],
        out_specs=pl.BlockSpec((TB, D_pad), lambda i: (i, 0)),
        out_shape=jax.ShapeDtypeStruct((B, D_pad), jnp.float32),
        scratch_shapes=[pltpu.VMEM((TB, N, D_pad), jnp.float32)],
        compiler_params=pltpu.CompilerParams(
            dimension_semantics=("parallel",)),  # batch tiles shard across TCs on v7x
    )(caps_output, weights, b_logits)
    return out[:, :D_out] if D_pad != D_out else out


def caps_layer_reference(caps_output, weights, b_logits, n_iterations=3):
    """Pure-JAX reference mirroring the PyTorch forward + agreement routing."""
    B, N, D_in = caps_output.shape
    u = jnp.einsum("bni,io->bno", caps_output, weights)

    def squash(s):
        sq = jnp.sum(s * s, axis=-1, keepdims=True)
        return s * (sq / (1.0 + sq)) * lax.rsqrt(sq + 1e-9)

    b = jnp.broadcast_to(b_logits, (B, N))
    c = jax.nn.softmax(b, axis=-1)
    v = squash(jnp.sum(c[:, :, None] * u, axis=1))
    for _ in range(n_iterations):
        b = b + jnp.sum(u * v[:, None, :], axis=-1)
        c = jax.nn.softmax(b, axis=-1)
        v = squash(jnp.sum(c[:, :, None] * u, axis=1))
    return v


if __name__ == "__main__":
    # Small shapes implied by the module's forward.
    B, INPUT_CAPS, INPUT_DIM, OUTPUT_DIM = 2, 8, 16, 32
    N_ITER = 3

    key = jax.random.PRNGKey(0)
    k_x, k_w = jax.random.split(key)

    caps_output = jax.random.normal(k_x, (B, INPUT_CAPS, INPUT_DIM), dtype=jnp.float32)

    # reset_parameters(): weights ~ U(-stdv, stdv), stdv = 1/sqrt(input_caps)
    stdv = 1.0 / (INPUT_CAPS ** 0.5)
    weights = jax.random.uniform(
        k_w, (INPUT_DIM, OUTPUT_DIM), minval=-stdv, maxval=stdv, dtype=jnp.float32)

    # routing logits (zeros, as in standard agreement routing)
    b_logits = jnp.zeros((1, INPUT_CAPS), dtype=jnp.float32)

    v = caps_layer_forward(caps_output, weights, b_logits, n_iterations=N_ITER)
    v = jax.block_until_ready(v)

    v_ref = caps_layer_reference(caps_output, weights, b_logits, n_iterations=N_ITER)
    assert v.shape == (B, OUTPUT_DIM)
    # Tolerance accounts for EUP approximate-reciprocal use in softmax/squash.
    assert jnp.allclose(v, v_ref, atol=3e-3, rtol=3e-3), "mismatch vs JAX reference"

    print("KERNEL_OK")
</pallas_src>

<mosaic_0001>
module attributes {stable_mosaic.version = 11 : i64} {
  func.func @_caps_layer_kernel(%arg0: i32, %arg1: memref<2x8x16xf32, #tpu.memory_space<vmem>>, %arg2: memref<16x128xf32, #tpu.memory_space<vmem>>, %arg3: memref<1x8xf32, #tpu.memory_space<vmem>>, %arg4: memref<2x128xf32, #tpu.memory_space<vmem>>, %arg5: memref<2x8x128xf32, #tpu.memory_space<vmem>>) attributes {dimension_semantics = [#tpu.dimension_semantics<parallel>], iteration_bounds = array<i64: 1>, scalar_prefetch = 0 : i64, scratch_operands = 1 : i64, tpu.core_type = #tpu.core_type<tc>, window_params = [{transform_indices = @transform_0, window_bounds = array<i64: 2, 8, 16>}, {pipeline_mode = #tpu.pipeline_mode<synchronous>, transform_indices = @transform_1, window_bounds = array<i64: 16, 128>}, {pipeline_mode = #tpu.pipeline_mode<synchronous>, transform_indices = @transform_2, window_bounds = array<i64: 1, 8>}, {transform_indices = @transform_3, window_bounds = array<i64: 2, 128>}]} {
    %c0 = arith.constant 0 : index
    %c0_0 = arith.constant 0 : index
    %c0_1 = arith.constant 0 : index
    %0 = vector.load %arg1[%c0, %c0_0, %c0_1] : memref<2x8x16xf32, #tpu.memory_space<vmem>>, vector<2x8x16xf32>
    %c0_2 = arith.constant 0 : index
    %c0_3 = arith.constant 0 : index
    %1 = vector.load %arg2[%c0_2, %c0_3] : memref<16x128xf32, #tpu.memory_space<vmem>>, vector<16x128xf32>
    %2 = vector.shape_cast %0 : vector<2x8x16xf32> to vector<16x16xf32>
    %cst = arith.constant dense<0.000000e+00> : vector<16x128xf32>
    %3 = tpu.matmul %2, %1, %cst {dimension_numbers = #tpu.dot_dimension_numbers<[1], [0], [0], [1], [0, 0, 1, 1], [], []>} : vector<16x16xf32>, vector<16x128xf32>, vector<16x128xf32> -> vector<16x128xf32>
    %4 = vector.shape_cast %3 : vector<16x128xf32> to vector<2x8x128xf32>
    %c0_4 = arith.constant 0 : index
    %c0_5 = arith.constant 0 : index
    %c0_6 = arith.constant 0 : index
    %5 = vector.load %arg5[%c0_4, %c0_5, %c0_6] : memref<2x8x128xf32, #tpu.memory_space<vmem>>, vector<2x8x128xf32>
    tpu.vector_store %arg5[%c0_4, %c0_5, %c0_6], %4 {strides = array<i32>} : memref<2x8x128xf32, #tpu.memory_space<vmem>>, vector<2x8x128xf32>,
    %c0_7 = arith.constant 0 : index
    %c0_8 = arith.constant 0 : index
    %6 = vector.load %arg3[%c0_7, %c0_8] : memref<1x8xf32, #tpu.memory_space<vmem>>, vector<1x8xf32>
    %7 = vector.shape_cast %6 : vector<1x8xf32> to vector<1x1x8xf32>
    %8 = vector.shape_cast %7 : vector<1x1x8xf32> to vector<1x1x8xf32>
    %9 = vector.broadcast %8 : vector<1x1x8xf32> to vector<2x1x8xf32>
    %cst_9 = arith.constant dense<0xFF800000> : vector<1x1xf32>
    %10 = vector.multi_reduction <maximumf>, %7, %cst_9 [2] : vector<1x1x8xf32> to vector<1x1xf32>
    %11 = vector.shape_cast %10 : vector<1x1xf32> to vector<1x1x1xf32>
    %12 = vector.broadcast %11 : vector<1x1x1xf32> to vector<1x1x8xf32>
    %13 = arith.subf %7, %12 : vector<1x1x8xf32>
    %14 = math.exp %13 : vector<1x1x8xf32>
    %cst_10 = arith.constant dense<0.000000e+00> : vector<1x1xf32>
    %15 = vector.multi_reduction <add>, %14, %cst_10 [2] : vector<1x1x8xf32> to vector<1x1xf32>
    %16 = vector.shape_cast %15 : vector<1x1xf32> to vector<1x1x1xf32>
    %17 = tpu.reciprocal %16 {approx = true} : vector<1x1x1xf32> -> vector<1x1x1xf32>
    %18 = vector.broadcast %17 : vector<1x1x1xf32> to vector<1x1x8xf32>
    %19 = arith.mulf %14, %18 : vector<1x1x8xf32>
    %20 = vector.shape_cast %19 : vector<1x1x8xf32> to vector<1x1x8xf32>
    %21 = vector.broadcast %20 : vector<1x1x8xf32> to vector<2x1x8xf32>
    %c0_11 = arith.constant 0 : index
    %c0_12 = arith.constant 0 : index
    %c0_13 = arith.constant 0 : index
    %22 = vector.load %arg5[%c0_11, %c0_12, %c0_13] : memref<2x8x128xf32, #tpu.memory_space<vmem>>, vector<2x8x128xf32>
    "tpu.trace_start"() <{level = 10 : i32, message = "bqn,bnd->bqd"}> : () -> ()
    %cst_14 = arith.constant dense<0.000000e+00> : vector<2x1x128xf32>
    %23 = tpu.matmul %21, %22, %cst_14 {dimension_numbers = #tpu.dot_dimension_numbers<[2], [1], [1], [2], [0, 0, 0, 1, 1, 2], [0], [0]>} : vector<2x1x8xf32>, vector<2x8x128xf32>, vector<2x1x128xf32> -> vector<2x1x128xf32>
    "tpu.trace_stop"() : () -> ()
    %24 = arith.mulf %23, %23 : vector<2x1x128xf32>
    %cst_15 = arith.constant dense<0.000000e+00> : vector<2x1xf32>
    %25 = vector.multi_reduction <add>, %24, %cst_15 [2] : vector<2x1x128xf32> to vector<2x1xf32>
    %26 = vector.shape_cast %25 : vector<2x1xf32> to vector<2x1x1xf32>
    %27 = vector.broadcast %26 : vector<2x1x1xf32> to vector<2x1x128xf32>
    %28 = arith.mulf %23, %27 : vector<2x1x128xf32>
    %cst_16 = arith.constant 1.000000e+00 : f32
    %29 = vector.broadcast %cst_16 : f32 to vector<2x1x1xf32>
    %30 = arith.addf %29, %26 : vector<2x1x1xf32>
    %31 = tpu.reciprocal %30 {approx = true} : vector<2x1x1xf32> -> vector<2x1x1xf32>
    %32 = vector.broadcast %31 : vector<2x1x1xf32> to vector<2x1x128xf32>
    %33 = arith.mulf %28, %32 : vector<2x1x128xf32>
    %cst_17 = arith.constant 9.99999971E-10 : f32
    %34 = vector.broadcast %cst_17 : f32 to vector<2x1x1xf32>
    %35 = arith.addf %26, %34 : vector<2x1x1xf32>
    %36 = math.rsqrt %35 : vector<2x1x1xf32>
    %37 = vector.broadcast %36 : vector<2x1x1xf32> to vector<2x1x128xf32>
    %38 = arith.mulf %33, %37 : vector<2x1x128xf32>
    %c0_18 = arith.constant 0 : index
    %c0_19 = arith.constant 0 : index
    %c0_20 = arith.constant 0 : index
    %39 = vector.load %arg5[%c0_18, %c0_19, %c0_20] : memref<2x8x128xf32, #tpu.memory_space<vmem>>, vector<2x8x128xf32>
    "tpu.trace_start"() <{level = 10 : i32, message = "bqd,bnd->bqn"}> : () -> ()
    %cst_21 = arith.constant dense<0.000000e+00> : vector<2x1x8xf32>
    %40 = tpu.matmul %38, %39, %cst_21 {dimension_numbers = #tpu.dot_dimension_numbers<[2], [2], [1], [1], [0, 0, 0, 1, 1, 1], [0], [0]>} : vector<2x1x128xf32>, vector<2x8x128xf32>, vector<2x1x8xf32> -> vector<2x1x8xf32>
    "tpu.trace_stop"() : () -> ()
    %41 = arith.addf %9, %40 : vector<2x1x8xf32>
    %cst_22 = arith.constant dense<0xFF800000> : vector<2x1xf32>
    %42 = vector.multi_reduction <maximumf>, %41, %cst_22 [2] : vector<2x1x8xf32> to vector<2x1xf32>
    %43 = vector.shape_cast %42 : vector<2x1xf32> to vector<2x1x1xf32>
    %44 = vector.broadcast %43 : vector<2x1x1xf32> to vector<2x1x8xf32>
    %45 = arith.subf %41, %44 : vector<2x1x8xf32>
    %46 = math.exp %45 : vector<2x1x8xf32>
    %cst_23 = arith.constant dense<0.000000e+00> : vector<2x1xf32>
    %47 = vector.multi_reduction <add>, %46, %cst_23 [2] : vector<2x1x8xf32> to vector<2x1xf32>
    %48 = vector.shape_cast %47 : vector<2x1xf32> to vector<2x1x1xf32>
    %49 = tpu.reciprocal %48 {approx = true} : vector<2x1x1xf32> -> vector<2x1x1xf32>
    %50 = vector.broadcast %49 : vector<2x1x1xf32> to vector<2x1x8xf32>
    %51 = arith.mulf %46, %50 : vector<2x1x8xf32>
    "tpu.trace_start"() <{level = 10 : i32, message = "bqn,bnd->bqd"}> : () -> ()
    %cst_24 = arith.constant dense<0.000000e+00> : vector<2x1x128xf32>
    %52 = tpu.matmul %51, %39, %cst_24 {dimension_numbers = #tpu.dot_dimension_numbers<[2], [1], [1], [2], [0, 0, 0, 1, 1, 2], [0], [0]>} : vector<2x1x8xf32>, vector<2x8x128xf32>, vector<2x1x128xf32> -> vector<2x1x128xf32>
    "tpu.trace_stop"() : () -> ()
    %53 = arith.mulf %52, %52 : vector<2x1x128xf32>
    %cst_25 = arith.constant dense<0.000000e+00> : vector<2x1xf32>
    %54 = vector.multi_reduction <add>, %53, %cst_25 [2] : vector<2x1x128xf32> to vector<2x1xf32>
    %55 = vector.shape_cast %54 : vector<2x1xf32> to vector<2x1x1xf32>
    %56 = vector.broadcast %55 : vector<2x1x1xf32> to vector<2x1x128xf32>
    %57 = arith.mulf %52, %56 : vector<2x1x128xf32>
    %cst_26 = arith.constant 1.000000e+00 : f32
    %58 = vector.broadcast %cst_26 : f32 to vector<2x1x1xf32>
    %59 = arith.addf %58, %55 : vector<2x1x1xf32>
    %60 = tpu.reciprocal %59 {approx = true} : vector<2x1x1xf32> -> vector<2x1x1xf32>
    %61 = vector.broadcast %60 : vector<2x1x1xf32> to vector<2x1x128xf32>
    %62 = arith.mulf %57, %61 : vector<2x1x128xf32>
    %cst_27 = arith.constant 9.99999971E-10 : f32
    %63 = vector.broadcast %cst_27 : f32 to vector<2x1x1xf32>
    %64 = arith.addf %55, %63 : vector<2x1x1xf32>
    %65 = math.rsqrt %64 : vector<2x1x1xf32>
    %66 = vector.broadcast %65 : vector<2x1x1xf32> to vector<2x1x128xf32>
    %67 = arith.mulf %62, %66 : vector<2x1x128xf32>
    %c0_28 = arith.constant 0 : index
    %c0_29 = arith.constant 0 : index
    %c0_30 = arith.constant 0 : index
    %68 = vector.load %arg5[%c0_28, %c0_29, %c0_30] : memref<2x8x128xf32, #tpu.memory_space<vmem>>, vector<2x8x128xf32>
    "tpu.trace_start"() <{level = 10 : i32, message = "bqd,bnd->bqn"}> : () -> ()
    %cst_31 = arith.constant dense<0.000000e+00> : vector<2x1x8xf32>
    %69 = tpu.matmul %67, %68, %cst_31 {dimension_numbers = #tpu.dot_dimension_numbers<[2], [2], [1], [1], [0, 0, 0, 1, 1, 1], [0], [0]>} : vector<2x1x128xf32>, vector<2x8x128xf32>, vector<2x1x8xf32> -> vector<2x1x8xf32>
    "tpu.trace_stop"() : () -> ()
    %70 = arith.addf %41, %69 : vector<2x1x8xf32>
    %cst_32 = arith.constant dense<0xFF800000> : vector<2x1xf32>
    %71 = vector.multi_reduction <maximumf>, %70, %cst_32 [2] : vector<2x1x8xf32> to vector<2x1xf32>
    %72 = vector.shape_cast %71 : vector<2x1xf32> to vector<2x1x1xf32>
    %73 = vector.broadcast %72 : vector<2x1x1xf32> to vector<2x1x8xf32>
    %74 = arith.subf %70, %73 : vector<2x1x8xf32>
    %75 = math.exp %74 : vector<2x1x8xf32>
    %cst_33 = arith.constant dense<0.000000e+00> : vector<2x1xf32>
    %76 = vector.multi_reduction <add>, %75, %cst_33 [2] : vector<2x1x8xf32> to vector<2x1xf32>
    %77 = vector.shape_cast %76 : vector<2x1xf32> to vector<2x1x1xf32>
    %78 = tpu.reciprocal %77 {approx = true} : vector<2x1x1xf32> -> vector<2x1x1xf32>
    %79 = vector.broadcast %78 : vector<2x1x1xf32> to vector<2x1x8xf32>
    %80 = arith.mulf %75, %79 : vector<2x1x8xf32>
    "tpu.trace_start"() <{level = 10 : i32, message = "bqn,bnd->bqd"}> : () -> ()
    %cst_34 = arith.constant dense<0.000000e+00> : vector<2x1x128xf32>
    %81 = tpu.matmul %80, %68, %cst_34 {dimension_numbers = #tpu.dot_dimension_numbers<[2], [1], [1], [2], [0, 0, 0, 1, 1, 2], [0], [0]>} : vector<2x1x8xf32>, vector<2x8x128xf32>, vector<2x1x128xf32> -> vector<2x1x128xf32>
    "tpu.trace_stop"() : () -> ()
    %82 = arith.mulf %81, %81 : vector<2x1x128xf32>
    %cst_35 = arith.constant dense<0.000000e+00> : vector<2x1xf32>
    %83 = vector.multi_reduction <add>, %82, %cst_35 [2] : vector<2x1x128xf32> to vector<2x1xf32>
    %84 = vector.shape_cast %83 : vector<2x1xf32> to vector<2x1x1xf32>
    %85 = vector.broadcast %84 : vector<2x1x1xf32> to vector<2x1x128xf32>
    %86 = arith.mulf %81, %85 : vector<2x1x128xf32>
    %cst_36 = arith.constant 1.000000e+00 : f32
    %87 = vector.broadcast %cst_36 : f32 to vector<2x1x1xf32>
    %88 = arith.addf %87, %84 : vector<2x1x1xf32>
    %89 = tpu.reciprocal %88 {approx = true} : vector<2x1x1xf32> -> vector<2x1x1xf32>
    %90 = vector.broadcast %89 : vector<2x1x1xf32> to vector<2x1x128xf32>
    %91 = arith.mulf %86, %90 : vector<2x1x128xf32>
    %cst_37 = arith.constant 9.99999971E-10 : f32
    %92 = vector.broadcast %cst_37 : f32 to vector<2x1x1xf32>
    %93 = arith.addf %84, %92 : vector<2x1x1xf32>
    %94 = math.rsqrt %93 : vector<2x1x1xf32>
    %95 = vector.broadcast %94 : vector<2x1x1xf32> to vector<2x1x128xf32>
    %96 = arith.mulf %91, %95 : vector<2x1x128xf32>
    %c0_38 = arith.constant 0 : index
    %c0_39 = arith.constant 0 : index
    %c0_40 = arith.constant 0 : index
    %97 = vector.load %arg5[%c0_38, %c0_39, %c0_40] : memref<2x8x128xf32, #tpu.memory_space<vmem>>, vector<2x8x128xf32>
    "tpu.trace_start"() <{level = 10 : i32, message = "bqd,bnd->bqn"}> : () -> ()
    %cst_41 = arith.constant dense<0.000000e+00> : vector<2x1x8xf32>
    %98 = tpu.matmul %96, %97, %cst_41 {dimension_numbers = #tpu.dot_dimension_numbers<[2], [2], [1], [1], [0, 0, 0, 1, 1, 1], [0], [0]>} : vector<2x1x128xf32>, vector<2x8x128xf32>, vector<2x1x8xf32> -> vector<2x1x8xf32>
    "tpu.trace_stop"() : () -> ()
    %99 = arith.addf %70, %98 : vector<2x1x8xf32>
    %cst_42 = arith.constant dense<0xFF800000> : vector<2x1xf32>
    %100 = vector.multi_reduction <maximumf>, %99, %cst_42 [2] : vector<2x1x8xf32> to vector<2x1xf32>
    %101 = vector.shape_cast %100 : vector<2x1xf32> to vector<2x1x1xf32>
    %102 = vector.broadcast %101 : vector<2x1x1xf32> to vector<2x1x8xf32>
    %103 = arith.subf %99, %102 : vector<2x1x8xf32>
    %104 = math.exp %103 : vector<2x1x8xf32>
    %cst_43 = arith.constant dense<0.000000e+00> : vector<2x1xf32>
    %105 = vector.multi_reduction <add>, %104, %cst_43 [2] : vector<2x1x8xf32> to vector<2x1xf32>
    %106 = vector.shape_cast %105 : vector<2x1xf32> to vector<2x1x1xf32>
    %107 = tpu.reciprocal %106 {approx = true} : vector<2x1x1xf32> -> vector<2x1x1xf32>
    %108 = vector.broadcast %107 : vector<2x1x1xf32> to vector<2x1x8xf32>
    %109 = arith.mulf %104, %108 : vector<2x1x8xf32>
    "tpu.trace_start"() <{level = 10 : i32, message = "bqn,bnd->bqd"}> : () -> ()
    %cst_44 = arith.constant dense<0.000000e+00> : vector<2x1x128xf32>
    %110 = tpu.matmul %109, %97, %cst_44 {dimension_numbers = #tpu.dot_dimension_numbers<[2], [1], [1], [2], [0, 0, 0, 1, 1, 2], [0], [0]>} : vector<2x1x8xf32>, vector<2x8x128xf32>, vector<2x1x128xf32> -> vector<2x1x128xf32>
    "tpu.trace_stop"() : () -> ()
    %111 = arith.mulf %110, %110 : vector<2x1x128xf32>
    %cst_45 = arith.constant dense<0.000000e+00> : vector<2x1xf32>
    %112 = vector.multi_reduction <add>, %111, %cst_45 [2] : vector<2x1x128xf32> to vector<2x1xf32>
    %113 = vector.shape_cast %112 : vector<2x1xf32> to vector<2x1x1xf32>
    %114 = vector.broadcast %113 : vector<2x1x1xf32> to vector<2x1x128xf32>
    %115 = arith.mulf %110, %114 : vector<2x1x128xf32>
    %cst_46 = arith.constant 1.000000e+00 : f32
    %116 = vector.broadcast %cst_46 : f32 to vector<2x1x1xf32>
    %117 = arith.addf %116, %113 : vector<2x1x1xf32>
    %118 = tpu.reciprocal %117 {approx = true} : vector<2x1x1xf32> -> vector<2x1x1xf32>
    %119 = vector.broadcast %118 : vector<2x1x1xf32> to vector<2x1x128xf32>
    %120 = arith.mulf %115, %119 : vector<2x1x128xf32>
    %cst_47 = arith.constant 9.99999971E-10 : f32
    %121 = vector.broadcast %cst_47 : f32 to vector<2x1x1xf32>
    %122 = arith.addf %113, %121 : vector<2x1x1xf32>
    %123 = math.rsqrt %122 : vector<2x1x1xf32>
    %124 = vector.broadcast %123 : vector<2x1x1xf32> to vector<2x1x128xf32>
    %125 = arith.mulf %120, %124 : vector<2x1x128xf32>
    %126 = vector.shape_cast %125 : vector<2x1x128xf32> to vector<2x128xf32>
    %c0_48 = arith.constant 0 : index
    %c0_49 = arith.constant 0 : index
    %127 = vector.load %arg4[%c0_48, %c0_49] : memref<2x128xf32, #tpu.memory_space<vmem>>, vector<2x128xf32>
    tpu.vector_store %arg4[%c0_48, %c0_49], %126 {strides = array<i32>} : memref<2x128xf32, #tpu.memory_space<vmem>>, vector<2x128xf32>,
    return
  }
  func.func @transform_0(%arg0: i32) -> (i32, i32, i32) {
    %c0_i32 = arith.constant 0 : i32
    %c0_i32_0 = arith.constant 0 : i32
    %c0_i32_1 = arith.constant 0 : i32
    return %arg0, %c0_i32, %c0_i32_0 : i32, i32, i32
  }
  func.func @transform_1(%arg0: i32) -> (i32, i32) {
    %c0_i32 = arith.constant 0 : i32
    %c0_i32_0 = arith.constant 0 : i32
    %c0_i32_1 = arith.constant 0 : i32
    return %c0_i32, %c0_i32_0 : i32, i32
  }
  func.func @transform_2(%arg0: i32) -> (i32, i32) {
    %c0_i32 = arith.constant 0 : i32
    %c0_i32_0 = arith.constant 0 : i32
    %c0_i32_1 = arith.constant 0 : i32
    return %c0_i32, %c0_i32_0 : i32, i32
  }
  func.func @transform_3(%arg0: i32) -> (i32, i32) {
    %c0_i32 = arith.constant 0 : i32
    %c0_i32_0 = arith.constant 0 : i32
    return %arg0, %c0_i32 : i32, i32
  }
}

</mosaic_0001>

<llo_original>
// kernel: tpu_custom_call.1
$region0: #{tpu_custom_call.1}
  #allocation0 [shape = 'u32[]', space=smem, size = 0x4, offset = 0x4, fixed_abs, tag = 'smem constant byte address 0x4 - core index']
  #allocation1 [shape = 'u32[144,128]{1,0:T(1,128)}', space=vmem, size = 0x12000, scoped, tag = 'internal scratch']
  #allocation2 [shape = 'f32[2,8,128]{2,1,0:T(8,128)}', space=vmem, size = 0x2000, scoped, tag = 'scratch operand']
  %s0 = inlined_call_operand.hbm [shape: f32[2,8,16], index: 0, kind: input, shape index: {}]
  %s1 = inlined_call_operand.hbm [shape: f32[16,128], index: 1, kind: input, shape index: {}]
  %s2 = inlined_call_operand.vmem [shape: f32[1,8], index: 2, kind: input, shape index: {}]
  %s3 = inlined_call_operand.hbm [shape: f32[2,128], index: 3, kind: output, shape index: {}]
  %s4 = sld [smem:[#allocation0]]
  $region30: #{tpu_custom_call.1} parent=0
    _
  %s6 = ssub.s32 1, %s4
  %s7 = scalar_select 0, %s6, %s4
  $region1: #{tpu_custom_call.1} parent=0
    #allocation3 [shape = 'u8[8192]{0}', space=vmem, size = 0x2000, scoped, tag = 'input window, operand 0, single buffered']
    #allocation4 [shape = 's32[1]{0}', space=sflag, size = 0x4, scoped, tag = 'scoped memory for tpu_custom_call.1']
    #allocation5 [shape = 's32[1]{0}', space=sflag, size = 0x4, scoped, tag = 'scoped memory for tpu_custom_call.1']
    #allocation6 [shape = 'u8[8192]{0}', space=vmem, size = 0x2000, scoped, tag = 'input window, operand 1, single buffered']
    #allocation7 [shape = 's32[1]{0}', space=sflag, size = 0x4, scoped, tag = 'scoped memory for tpu_custom_call.1']
    #allocation8 [shape = 'u8[1024]{0}', space=vmem, size = 0x400, scoped, tag = 'output window, operand 0, single buffered']
    %8 = vsyncpa [#allocation4], 0
    %9 = vsyncpa [#allocation7], 0
    %10 = vsyncpa [#allocation5], 0
    // Predicated region
    $region2: #{tpu_custom_call.1} parent=1 // pred_check
      _
    $region3: #{tpu_custom_call.1} parent=1 // pred_check_branch
      %12 = sbr.rel (0) target = $region5
    $region4: #{tpu_custom_call.1} parent=1 // pred_region
      %s14 = ssub.s32 256, 256
      %15 = vsyncadd [#allocation4], %s14
      %s16 = sshll.u32 [#allocation3], 4
      %s17 = int_to_ptr.vmem [resolvable:$true] %s16
      %22 = dma.hbm_to_vmem [thread:$0]  %s0, 256, %s17, [#allocation4], 128, 128, 8
    $region5: #{tpu_custom_call.1} parent=1 // pred_fallthru
      _
    // Predicated region
    $region6: #{tpu_custom_call.1} parent=1 // pred_check
      _
    $region7: #{tpu_custom_call.1} parent=1 // pred_check_branch
      %24 = sbr.rel (0) target = $region9
    $region8: #{tpu_custom_call.1} parent=1 // pred_region
      %s26 = ssub.s32 256, 256
      %27 = vsyncadd [#allocation7], %s26
      %s28 = sshll.u32 [#allocation6], 4
      %s29 = int_to_ptr.vmem [resolvable:$true] %s28
      %34 = dma.hbm_to_vmem [thread:$0]  %s1, 256, %s29, [#allocation7], 128, 128, 8
    $region9: #{tpu_custom_call.1} parent=1 // pred_fallthru
      _
    // Predicated region
    $region10: #{tpu_custom_call.1} parent=1 // pred_check
      _
    $region11: #{tpu_custom_call.1} parent=1 // pred_check_branch
      %36 = sbr.rel (0) target = $region13
    $region12: #{tpu_custom_call.1} parent=1 // pred_region
      _
    $region13: #{tpu_custom_call.1} parent=1 // pred_fallthru
      _
    // Predicated region
    $region14: #{tpu_custom_call.1} parent=1 // pred_check
      _
    $region15: #{tpu_custom_call.1} parent=1 // pred_check_branch
      %38 = sbr.rel (0) target = $region17
    $region16: #{tpu_custom_call.1} parent=1 // pred_region
      %39 = dma.done [#allocation4], 256
    $region17: #{tpu_custom_call.1} parent=1 // pred_fallthru
      _
    // Predicated region
    $region18: #{tpu_custom_call.1} parent=1 // pred_check
      _
    $region19: #{tpu_custom_call.1} parent=1 // pred_check_branch
      %41 = sbr.rel (0) target = $region21
    $region20: #{tpu_custom_call.1} parent=1 // pred_region
      %42 = dma.done [#allocation7], 256
    $region21: #{tpu_custom_call.1} parent=1 // pred_fallthru
      _
    %v43 = vld [vmem:[#allocation3] sm:$0xff]
    %v44 = vld [vmem:[#allocation3 + $0x8] sm:$0xff]
    %v45 = vld [vmem:[#allocation6] sm:$0xff]
    %v46 = vld [vmem:[#allocation6 + $0x8] sm:$0xff]
    %vm47 = vcmask 130048
    %v49 = vsel %vm47, %v43, 0
    %v52 = vsel %vm47, %v44, 0
    %54 = vmatprep.subr.mxu0 0.0
    %55 = vmatpush1.msra.mxu0 %v45
    %56 = vmatprep.subr.mxu0 0.0
    %57 = vmatpush1.msra.mxu0 %v46
    %58 = vmatprep.subr.mxu0 0.0
    %59 = vmatpush1.msra.mxu0 0.0
    %60 = vmatprep.subr.mxu0 0.0
    %61 = vmatpush1.msra.mxu0 0.0
    %62 = vmatprep.subr.mxu0 0.0
    %63 = vmatpush1.msra.mxu0 0.0
    %64 = vmatprep.subr.mxu0 0.0
    %65 = vmatpush1.msra.mxu0 0.0
    %66 = vmatprep.subr.mxu0 0.0
    %67 = vmatpush1.msra.mxu0 0.0
    %68 = vmatprep.subr.mxu0 0.0
    %69 = vmatpush1.msra.mxu0 0.0
    %70 = vmatprep.subr.mxu0 0.0
    %71 = vmatpush1.msra.mxu0 0.0
    %72 = vmatprep.subr.mxu0 0.0
    %73 = vmatpush1.msra.mxu0 0.0
    %74 = vmatprep.subr.mxu0 0.0
    %75 = vmatpush1.msra.mxu0 0.0
    %76 = vmatprep.subr.mxu0 0.0
    %77 = vmatpush1.msra.mxu0 0.0
    %78 = vmatprep.subr.mxu0 0.0
    %79 = vmatpush1.msra.mxu0 0.0
    %80 = vmatprep.subr.mxu0 0.0
    %81 = vmatpush1.msra.mxu0 0.0
    %82 = vmatprep.subr.mxu0 0.0
    %83 = vmatpush1.msra.mxu0 0.0
    %84 = vmatprep.subr.mxu0 0.0
    %85 = vmatpush1.msra.mxu0 0.0
    %86 = vmatprep.subr.mxu0 0.0
    %87 = vmatpush1.msra.mxu0 0.0
    %88 = vmatprep.subr.mxu0 0.0
    %89 = vmatpush1.msra.mxu0 0.0
    %90 = vmatprep.subr.mxu0 0.0
    %91 = vmatpush1.msra.mxu0 0.0
    %92 = vmatprep.subr.mxu0 0.0
    %93 = vmatpush1.msra.mxu0 0.0
    %94 = vmatprep.subr.mxu0 0.0
    %95 = vmatpush1.msra.mxu0 0.0
    %96 = vmatprep.subr.mxu0 0.0
    %97 = vmatpush1.msra.mxu0 0.0
    %98 = vmatprep.subr.mxu0 0.0
    %99 = vmatpush1.msra.mxu0 0.0
    %100 = vmatprep.subr.mxu0 0.0
    %101 = vmatpush1.msra.mxu0 0.0
    %102 = vmatprep.subr.mxu0 0.0
    %103 = vmatpush1.msra.mxu0 0.0
    %104 = vmatprep.subr.mxu0 0.0
    %105 = vmatpush1.msra.mxu0 0.0
    %106 = vmatprep.subr.mxu0 0.0
    %107 = vmatpush1.msra.mxu0 0.0
    %108 = vmatprep.subr.mxu0 0.0
    %109 = vmatpush1.msra.mxu0 0.0
    %110 = vmatprep.subr.mxu0 0.0
    %111 = vmatpush1.msra.mxu0 0.0
    %112 = vmatprep.subr.mxu0 0.0
    %113 = vmatpush1.msra.mxu0 0.0
    %114 = vmatprep.subr.mxu0 0.0
    %115 = vmatpush1.msra.mxu0 0.0
    %116 = vmatprep.subr.mxu0 0.0
    %117 = vmatpush1.msra.mxu0 0.0
    %118 = vmatprep.mubr.f32.mxu0 0.0
    %119 = vmatmul.mubr.f32.gmra.mrb[0].mxu0 %v49
    %v120 = vpop.f32.mrb[0].mxu0
    %v121 = vadd.f32 0.0, %v120
    %v122 = vpop.f32.mrb[0].mxu0
    %123 = vmatprep.mubr.f32.mxu0 0.0
    %124 = vmatmul.mubr.f32.gmra.mrb[0].mxu0 %v52
    %v125 = vpop.f32.mrb[0].mxu0
    %v126 = vadd.f32 0.0, %v125
    %v127 = vpop.f32.mrb[0].mxu0
    %128 = vdwg.mxu0
    %129 = vst [vmem:[#allocation2] sm:$0xff] %v121
    %130 = vst [vmem:[#allocation2 + $0x8] sm:$0xff] %v126
    %v131 = vld [vmem:[%s2] sm:$0x1]
    %vm132 = vcmask 57344
    %v133 = vsel %vm132, %v131, -inf
    %134 = vmax.xlane.f32.xlu0 %v133
    %v135 = vpop.xlane.xlu0 %134
    %v136 = vsub.f32 %v131, %v135
    %v137 = vmul.f32 %v136, 1.442695
    %v138 = vpow.pop %v137
    %v139 = vsel %vm132, %v138, 0.0
    %140 = vadd.xlane.f32.xlu0 %v139
    %v141 = vpop.xlane.xlu0 %140
    %v142 = vrcp.pop %v141
    %v143 = vmul.f32 %v138, %v142
    %v144 = vld [vmem:[#allocation2] sm:$0xff]
    %v145 = vld [vmem:[#allocation2 + $0x8] sm:$0xff]
    %vm146 = vcmask 64512
    %v148 = vsel %vm146, %v143, 0
    %150 = vmatprep.subr.mxu0 0.0
    %151 = vmatpush1.msra.mxu0 %v144
    %152 = vmatprep.subr.mxu0 0.0
    %153 = vmatpush1.msra.mxu0 0.0
    %154 = vmatprep.subr.mxu0 0.0
    %155 = vmatpush1.msra.mxu0 0.0
    %156 = vmatprep.subr.mxu0 0.0
    %157 = vmatpush1.msra.mxu0 0.0
    %158 = vmatprep.subr.mxu0 0.0
    %159 = vmatpush1.msra.mxu0 0.0
    %160 = vmatprep.subr.mxu0 0.0
    %161 = vmatpush1.msra.mxu0 0.0
    %162 = vmatprep.subr.mxu0 0.0
    %163 = vmatpush1.msra.mxu0 0.0
    %164 = vmatprep.subr.mxu0 0.0
    %165 = vmatpush1.msra.mxu0 0.0
    %166 = vmatprep.subr.mxu0 0.0
    %167 = vmatpush1.msra.mxu0 0.0
    %168 = vmatprep.subr.mxu0 0.0
    %169 = vmatpush1.msra.mxu0 0.0
    %170 = vmatprep.subr.mxu0 0.0
    %171 = vmatpush1.msra.mxu0 0.0
    %172 = vmatprep.subr.mxu0 0.0
    %173 = vmatpush1.msra.mxu0 0.0
    %174 = vmatprep.subr.mxu0 0.0
    %175 = vmatpush1.msra.mxu0 0.0
    %176 = vmatprep.subr.mxu0 0.0
    %177 = vmatpush1.msra.mxu0 0.0
    %178 = vmatprep.subr.mxu0 0.0
    %179 = vmatpush1.msra.mxu0 0.0
    %180 = vmatprep.subr.mxu0 0.0
    %181 = vmatpush1.msra.mxu0 0.0
    %182 = vmatprep.subr.mxu0 0.0
    %183 = vmatpush1.msra.mxu0 0.0
    %184 = vmatprep.subr.mxu0 0.0
    %185 = vmatpush1.msra.mxu0 0.0
    %186 = vmatprep.subr.mxu0 0.0
    %187 = vmatpush1.msra.mxu0 0.0
    %188 = vmatprep.subr.mxu0 0.0
    %189 = vmatpush1.msra.mxu0 0.0
    %190 = vmatprep.subr.mxu0 0.0
    %191 = vmatpush1.msra.mxu0 0.0
    %192 = vmatprep.subr.mxu0 0.0
    %193 = vmatpush1.msra.mxu0 0.0
    %194 = vmatprep.subr.mxu0 0.0
    %195 = vmatpush1.msra.mxu0 0.0
    %196 = vmatprep.subr.mxu0 0.0
    %197 = vmatpush1.msra.mxu0 0.0
    %198 = vmatprep.subr.mxu0 0.0
    %199 = vmatpush1.msra.mxu0 0.0
    %200 = vmatprep.subr.mxu0 0.0
    %201 = vmatpush1.msra.mxu0 0.0
    %202 = vmatprep.subr.mxu0 0.0
    %203 = vmatpush1.msra.mxu0 0.0
    %204 = vmatprep.subr.mxu0 0.0
    %205 = vmatpush1.msra.mxu0 0.0
    %206 = vmatprep.subr.mxu0 0.0
    %207 = vmatpush1.msra.mxu0 0.0
    %208 = vmatprep.subr.mxu0 0.0
    %209 = vmatpush1.msra.mxu0 0.0
    %210 = vmatprep.subr.mxu0 0.0
    %211 = vmatpush1.msra.mxu0 0.0
    %212 = vmatprep.subr.mxu0 0.0
    %213 = vmatpush1.msra.mxu0 0.0
    %214 = vmatprep.mubr.f32.mxu0 0.0
    %215 = vmatmul.mubr.f32.gmra.mrb[0].mxu0 %v148
    %v216 = vpop.f32.mrb[0].mxu0
    %v217 = vadd.f32 0.0, %v216
    %v218 = vpop.f32.mrb[0].mxu0
    %219 = vdwg.mxu0
    %220 = vmatprep.subr.mxu0 0.0
    %221 = vmatpush1.msra.mxu0 %v145
    %222 = vmatprep.subr.mxu0 0.0
    %223 = vmatpush1.msra.mxu0 0.0
    %224 = vmatprep.subr.mxu0 0.0
    %225 = vmatpush1.msra.mxu0 0.0
    %226 = vmatprep.subr.mxu0 0.0
    %227 = vmatpush1.msra.mxu0 0.0
    %228 = vmatprep.subr.mxu0 0.0
    %229 = vmatpush1.msra.mxu0 0.0
    %230 = vmatprep.subr.mxu0 0.0
    %231 = vmatpush1.msra.mxu0 0.0
    %232 = vmatprep.subr.mxu0 0.0
    %233 = vmatpush1.msra.mxu0 0.0
    %234 = vmatprep.subr.mxu0 0.0
    %235 = vmatpush1.msra.mxu0 0.0
    %236 = vmatprep.subr.mxu0 0.0
    %237 = vmatpush1.msra.mxu0 0.0
    %238 = vmatprep.subr.mxu0 0.0
    %239 = vmatpush1.msra.mxu0 0.0
    %240 = vmatprep.subr.mxu0 0.0
    %241 = vmatpush1.msra.mxu0 0.0
    %242 = vmatprep.subr.mxu0 0.0
    %243 = vmatpush1.msra.mxu0 0.0
    %244 = vmatprep.subr.mxu0 0.0
    %245 = vmatpush1.msra.mxu0 0.0
    %246 = vmatprep.subr.mxu0 0.0
    %247 = vmatpush1.msra.mxu0 0.0
    %248 = vmatprep.subr.mxu0 0.0
    %249 = vmatpush1.msra.mxu0 0.0
    %250 = vmatprep.subr.mxu0 0.0
    %251 = vmatpush1.msra.mxu0 0.0
    %252 = vmatprep.subr.mxu0 0.0
    %253 = vmatpush1.msra.mxu0 0.0
    %254 = vmatprep.subr.mxu0 0.0
    %255 = vmatpush1.msra.mxu0 0.0
    %256 = vmatprep.subr.mxu0 0.0
    %257 = vmatpush1.msra.mxu0 0.0
    %258 = vmatprep.subr.mxu0 0.0
    %259 = vmatpush1.msra.mxu0 0.0
    %260 = vmatprep.subr.mxu0 0.0
    %261 = vmatpush1.msra.mxu0 0.0
    %262 = vmatprep.subr.mxu0 0.0
    %263 = vmatpush1.msra.mxu0 0.0
    %264 = vmatprep.subr.mxu0 0.0
    %265 = vmatpush1.msra.mxu0 0.0
    %266 = vmatprep.subr.mxu0 0.0
    %267 = vmatpush1.msra.mxu0 0.0
    %268 = vmatprep.subr.mxu0 0.0
    %269 = vmatpush1.msra.mxu0 0.0
    %270 = vmatprep.subr.mxu0 0.0
    %271 = vmatpush1.msra.mxu0 0.0
    %272 = vmatprep.subr.mxu0 0.0
    %273 = vmatpush1.msra.mxu0 0.0
    %274 = vmatprep.subr.mxu0 0.0
    %275 = vmatpush1.msra.mxu0 0.0
    %276 = vmatprep.subr.mxu0 0.0
    %277 = vmatpush1.msra.mxu0 0.0
    %278 = vmatprep.subr.mxu0 0.0
    %279 = vmatpush1.msra.mxu0 0.0
    %280 = vmatprep.subr.mxu0 0.0
    %281 = vmatpush1.msra.mxu0 0.0
    %282 = vmatprep.subr.mxu0 0.0
    %283 = vmatpush1.msra.mxu0 0.0
    %284 = vmatprep.mubr.f32.mxu0 0.0
    %285 = vmatmul.mubr.f32.gmra.mrb[0].mxu0 %v148
    %v286 = vpop.f32.mrb[0].mxu0
    %v287 = vadd.f32 0.0, %v286
    %v288 = vpop.f32.mrb[0].mxu0
    %289 = vdwg.mxu0
    %v290 = vmul.f32 %v217, %v217
    %v291 = vmul.f32 %v287, %v287
    %vm292 = vcmask 1040384
    %v293 = vsel %vm292, %v290, 0.0
    %294 = vadd.xlane.f32.xlu0 %v293
    %v295 = vpop.xlane.xlu0 %294
    %v296 = vsel %vm292, %v291, 0.0
    %297 = vadd.xlane.f32.xlu0 %v296
    %v298 = vpop.xlane.xlu0 %297
    %v299 = vmul.f32 %v217, %v295
    %v300 = vmul.f32 %v287, %v298
    %v301 = vadd.f32 %v295, 1.0
    %v302 = vadd.f32 %v298, 1.0
    %v303 = vrcp.pop %v301
    %v304 = vrcp.pop %v302
    %v305 = vmul.f32 %v299, %v303
    %v306 = vmul.f32 %v300, %v304
    %v307 = vadd.f32 %v295, 1e-09
    %v308 = vadd.f32 %v298, 1e-09
    %v309 = vrsqrt.pop %v307
    %v310 = vrsqrt.pop %v308
    %v311 = vmul.f32 %v305, %v309
    %v312 = vmul.f32 %v306, %v310
    %v313 = vld [vmem:[#allocation2] sm:$0xff]
    %v314 = vld [vmem:[#allocation2 + $0x8] sm:$0xff]
    %315 = vmatprep.subr.mxu0 0.0
    %316 = vmatpush1.xpose.msra.mxu0 %v313
    %317 = vmatprep.subr.mxu0 0.0
    %318 = vmatpush1.xpose.msra.mxu0 0.0
    %319 = vmatprep.subr.mxu0 0.0
    %320 = vmatpush1.xpose.msra.mxu0 0.0
    %321 = vmatprep.subr.mxu0 0.0
    %322 = vmatpush1.xpose.msra.mxu0 0.0
    %323 = vmatprep.subr.mxu0 0.0
    %324 = vmatpush1.xpose.msra.mxu0 0.0
    %325 = vmatprep.subr.mxu0 0.0
    %326 = vmatpush1.xpose.msra.mxu0 0.0
    %327 = vmatprep.subr.mxu0 0.0
    %328 = vmatpush1.xpose.msra.mxu0 0.0
    %329 = vmatprep.subr.mxu0 0.0
    %330 = vmatpush1.xpose.msra.mxu0 0.0
    %331 = vmatprep.subr.mxu0 0.0
    %332 = vmatpush1.xpose.msra.mxu0 0.0
    %333 = vmatprep.subr.mxu0 0.0
    %334 = vmatpush1.xpose.msra.mxu0 0.0
    %335 = vmatprep.subr.mxu0 0.0
    %336 = vmatpush1.xpose.msra.mxu0 0.0
    %337 = vmatprep.subr.mxu0 0.0
    %338 = vmatpush1.xpose.msra.mxu0 0.0
    %339 = vmatprep.subr.mxu0 0.0
    %340 = vmatpush1.xpose.msra.mxu0 0.0
    %341 = vmatprep.subr.mxu0 0.0
    %342 = vmatpush1.xpose.msra.mxu0 0.0
    %343 = vmatprep.subr.mxu0 0.0
    %344 = vmatpush1.xpose.msra.mxu0 0.0
    %345 = vmatprep.subr.mxu0 0.0
    %346 = vmatpush1.xpose.msra.mxu0 0.0
    %347 = vmatprep.subr.mxu0 0.0
    %348 = vmatpush1.xpose.msra.mxu0 0.0
    %349 = vmatprep.subr.mxu0 0.0
    %350 = vmatpush1.xpose.msra.mxu0 0.0
    %351 = vmatprep.subr.mxu0 0.0
    %352 = vmatpush1.xpose.msra.mxu0 0.0
    %353 = vmatprep.subr.mxu0 0.0
    %354 = vmatpush1.xpose.msra.mxu0 0.0
    %355 = vmatprep.subr.mxu0 0.0
    %356 = vmatpush1.xpose.msra.mxu0 0.0
    %357 = vmatprep.subr.mxu0 0.0
    %358 = vmatpush1.xpose.msra.mxu0 0.0
    %359 = vmatprep.subr.mxu0 0.0
    %360 = vmatpush1.xpose.msra.mxu0 0.0
    %361 = vmatprep.subr.mxu0 0.0
    %362 = vmatpush1.xpose.msra.mxu0 0.0
    %363 = vmatprep.subr.mxu0 0.0
    %364 = vmatpush1.xpose.msra.mxu0 0.0
    %365 = vmatprep.subr.mxu0 0.0
    %366 = vmatpush1.xpose.msra.mxu0 0.0
    %367 = vmatprep.subr.mxu0 0.0
    %368 = vmatpush1.xpose.msra.mxu0 0.0
    %369 = vmatprep.subr.mxu0 0.0
    %370 = vmatpush1.xpose.msra.mxu0 0.0
    %371 = vmatprep.subr.mxu0 0.0
    %372 = vmatpush1.xpose.msra.mxu0 0.0
    %373 = vmatprep.subr.mxu0 0.0
    %374 = vmatpush1.xpose.msra.mxu0 0.0
    %375 = vmatprep.subr.mxu0 0.0
    %376 = vmatpush1.xpose.msra.mxu0 0.0
    %377 = vmatprep.subr.mxu0 0.0
    %378 = vmatpush1.xpose.msra.mxu0 0.0
    %379 = vmatprep.mubr.f32.mxu0 0.0
    %380 = vmatmul.mubr.f32.gmra.mrb[0].mxu0 %v311
    %v381 = vpop.f32.mrb[0].mxu0
    %v382 = vadd.f32 0.0, %v381
    %v383 = vpop.f32.mrb[0].mxu0
    %384 = vdwg.mxu0
    %385 = vmatprep.subr.mxu0 0.0
    %386 = vmatpush1.xpose.msra.mxu0 %v314
    %387 = vmatprep.subr.mxu0 0.0
    %388 = vmatpush1.xpose.msra.mxu0 0.0
    %389 = vmatprep.subr.mxu0 0.0
    %390 = vmatpush1.xpose.msra.mxu0 0.0
    %391 = vmatprep.subr.mxu0 0.0
    %392 = vmatpush1.xpose.msra.mxu0 0.0
    %393 = vmatprep.subr.mxu0 0.0
    %394 = vmatpush1.xpose.msra.mxu0 0.0
    %395 = vmatprep.subr.mxu0 0.0
    %396 = vmatpush1.xpose.msra.mxu0 0.0
    %397 = vmatprep.subr.mxu0 0.0
    %398 = vmatpush1.xpose.msra.mxu0 0.0
    %399 = vmatprep.subr.mxu0 0.0
    %400 = vmatpush1.xpose.msra.mxu0 0.0
    %401 = vmatprep.subr.mxu0 0.0
    %402 = vmatpush1.xpose.msra.mxu0 0.0
    %403 = vmatprep.subr.mxu0 0.0
    %404 = vmatpush1.xpose.msra.mxu0 0.0
    %405 = vmatprep.subr.mxu0 0.0
    %406 = vmatpush1.xpose.msra.mxu0 0.0
    %407 = vmatprep.subr.mxu0 0.0
    %408 = vmatpush1.xpose.msra.mxu0 0.0
    %409 = vmatprep.subr.mxu0 0.0
    %410 = vmatpush1.xpose.msra.mxu0 0.0
    %411 = vmatprep.subr.mxu0 0.0
    %412 = vmatpush1.xpose.msra.mxu0 0.0
    %413 = vmatprep.subr.mxu0 0.0
    %414 = vmatpush1.xpose.msra.mxu0 0.0
    %415 = vmatprep.subr.mxu0 0.0
    %416 = vmatpush1.xpose.msra.mxu0 0.0
    %417 = vmatprep.subr.mxu0 0.0
    %418 = vmatpush1.xpose.msra.mxu0 0.0
    %419 = vmatprep.subr.mxu0 0.0
    %420 = vmatpush1.xpose.msra.mxu0 0.0
    %421 = vmatprep.subr.mxu0 0.0
    %422 = vmatpush1.xpose.msra.mxu0 0.0
    %423 = vmatprep.subr.mxu0 0.0
    %424 = vmatpush1.xpose.msra.mxu0 0.0
    %425 = vmatprep.subr.mxu0 0.0
    %426 = vmatpush1.xpose.msra.mxu0 0.0
    %427 = vmatprep.subr.mxu0 0.0
    %428 = vmatpush1.xpose.msra.mxu0 0.0
    %429 = vmatprep.subr.mxu0 0.0
    %430 = vmatpush1.xpose.msra.mxu0 0.0
    %431 = vmatprep.subr.mxu0 0.0
    %432 = vmatpush1.xpose.msra.mxu0 0.0
    %433 = vmatprep.subr.mxu0 0.0
    %434 = vmatpush1.xpose.msra.mxu0 0.0
    %435 = vmatprep.subr.mxu0 0.0
    %436 = vmatpush1.xpose.msra.mxu0 0.0
    %437 = vmatprep.subr.mxu0 0.0
    %438 = vmatpush1.xpose.msra.mxu0 0.0
    %439 = vmatprep.subr.mxu0 0.0
    %440 = vmatpush1.xpose.msra.mxu0 0.0
    %441 = vmatprep.subr.mxu0 0.0
    %442 = vmatpush1.xpose.msra.mxu0 0.0
    %443 = vmatprep.subr.mxu0 0.0
    %444 = vmatpush1.xpose.msra.mxu0 0.0
    %445 = vmatprep.subr.mxu0 0.0
    %446 = vmatpush1.xpose.msra.mxu0 0.0
    %447 = vmatprep.subr.mxu0 0.0
    %448 = vmatpush1.xpose.msra.mxu0 0.0
    %449 = vmatprep.mubr.f32.mxu0 0.0
    %450 = vmatmul.mubr.f32.gmra.mrb[0].mxu0 %v312
    %v451 = vpop.f32.mrb[0].mxu0
    %v452 = vadd.f32 0.0, %v451
    %v453 = vpop.f32.mrb[0].mxu0
    %454 = vdwg.mxu0
    %v455 = vadd.f32 %v131, %v382
    %v456 = vadd.f32 %v131, %v452
    %v457 = vsel %vm132, %v455, -inf
    %458 = vmax.xlane.f32.xlu0 %v457
    %v459 = vpop.xlane.xlu0 %458
    %v460 = vsel %vm132, %v456, -inf
    %461 = vmax.xlane.f32.xlu0 %v460
    %v462 = vpop.xlane.xlu0 %461
    %v463 = vsub.f32 %v455, %v459
    %v464 = vsub.f32 %v456, %v462
    %v465 = vmul.f32 %v463, 1.442695
    %v466 = vpow.pop %v465
    %v467 = vmul.f32 %v464, 1.442695
    %v468 = vpow.pop %v467
    %v469 = vsel %vm132, %v466, 0.0
    %470 = vadd.xlane.f32.xlu0 %v469
    %v471 = vpop.xlane.xlu0 %470
    %v472 = vsel %vm132, %v468, 0.0
    %473 = vadd.xlane.f32.xlu0 %v472
    %v474 = vpop.xlane.xlu0 %473
    %v475 = vrcp.pop %v471
    %v476 = vrcp.pop %v474
    %v477 = vmul.f32 %v466, %v475
    %v478 = vmul.f32 %v468, %v476
    %v480 = vsel %vm146, %v477, 0
    %482 = vmatprep.subr.mxu0 0.0
    %483 = vmatpush1.msra.mxu0 %v313
    %484 = vmatprep.subr.mxu0 0.0
    %485 = vmatpush1.msra.mxu0 0.0
    %486 = vmatprep.subr.mxu0 0.0
    %487 = vmatpush1.msra.mxu0 0.0
    %488 = vmatprep.subr.mxu0 0.0
    %489 = vmatpush1.msra.mxu0 0.0
    %490 = vmatprep.subr.mxu0 0.0
    %491 = vmatpush1.msra.mxu0 0.0
    %492 = vmatprep.subr.mxu0 0.0
    %493 = vmatpush1.msra.mxu0 0.0
    %494 = vmatprep.subr.mxu0 0.0
    %495 = vmatpush1.msra.mxu0 0.0
    %496 = vmatprep.subr.mxu0 0.0
    %497 = vmatpush1.msra.mxu0 0.0
    %498 = vmatprep.subr.mxu0 0.0
    %499 = vmatpush1.msra.mxu0 0.0
    %500 = vmatprep.subr.mxu0 0.0
    %501 = vmatpush1.msra.mxu0 0.0
    %502 = vmatprep.subr.mxu0 0.0
    %503 = vmatpush1.msra.mxu0 0.0
    %504 = vmatprep.subr.mxu0 0.0
    %505 = vmatpush1.msra.mxu0 0.0
    %506 = vmatprep.subr.mxu0 0.0
    %507 = vmatpush1.msra.mxu0 0.0
    %508 = vmatprep.subr.mxu0 0.0
    %509 = vmatpush1.msra.mxu0 0.0
    %510 = vmatprep.subr.mxu0 0.0
    %511 = vmatpush1.msra.mxu0 0.0
    %512 = vmatprep.subr.mxu0 0.0
    %513 = vmatpush1.msra.mxu0 0.0
    %514 = vmatprep.subr.mxu0 0.0
    %515 = vmatpush1.msra.mxu0 0.0
    %516 = vmatprep.subr.mxu0 0.0
    %517 = vmatpush1.msra.mxu0 0.0
    %518 = vmatprep.subr.mxu0 0.0
    %519 = vmatpush1.msra.mxu0 0.0
    %520 = vmatprep.subr.mxu0 0.0
    %521 = vmatpush1.msra.mxu0 0.0
    %522 = vmatprep.subr.mxu0 0.0
    %523 = vmatpush1.msra.mxu0 0.0
    %524 = vmatprep.subr.mxu0 0.0
    %525 = vmatpush1.msra.mxu0 0.0
    %526 = vmatprep.subr.mxu0 0.0
    %527 = vmatpush1.msra.mxu0 0.0
    %528 = vmatprep.subr.mxu0 0.0
    %529 = vmatpush1.msra.mxu0 0.0
    %530 = vmatprep.subr.mxu0 0.0
    %531 = vmatpush1.msra.mxu0 0.0
    %532 = vmatprep.subr.mxu0 0.0
    %533 = vmatpush1.msra.mxu0 0.0
    %534 = vmatprep.subr.mxu0 0.0
    %535 = vmatpush1.msra.mxu0 0.0
    %536 = vmatprep.subr.mxu0 0.0
    %537 = vmatpush1.msra.mxu0 0.0
    %538 = vmatprep.subr.mxu0 0.0
    %539 = vmatpush1.msra.mxu0 0.0
    %540 = vmatprep.subr.mxu0 0.0
    %541 = vmatpush1.msra.mxu0 0.0
    %542 = vmatprep.subr.mxu0 0.0
    %543 = vmatpush1.msra.mxu0 0.0
    %544 = vmatprep.subr.mxu0 0.0
    %545 = vmatpush1.msra.mxu0 0.0
    %546 = vmatprep.mubr.f32.mxu0 0.0
    %547 = vmatmul.mubr.f32.gmra.mrb[0].mxu0 %v480
    %v548 = vpop.f32.mrb[0].mxu0
    %v549 = vadd.f32 0.0, %v548
    %v550 = vpop.f32.mrb[0].mxu0
    %551 = vdwg.mxu0
    %v553 = vsel %vm146, %v478, 0
    %555 = vmatprep.subr.mxu0 0.0
    %556 = vmatpush1.msra.mxu0 %v314
    %557 = vmatprep.subr.mxu0 0.0
    %558 = vmatpush1.msra.mxu0 0.0
    %559 = vmatprep.subr.mxu0 0.0
    %560 = vmatpush1.msra.mxu0 0.0
    %561 = vmatprep.subr.mxu0 0.0
    %562 = vmatpush1.msra.mxu0 0.0
    %563 = vmatprep.subr.mxu0 0.0
    %564 = vmatpush1.msra.mxu0 0.0
    %565 = vmatprep.subr.mxu0 0.0
    %566 = vmatpush1.msra.mxu0 0.0
    %567 = vmatprep.subr.mxu0 0.0
    %568 = vmatpush1.msra.mxu0 0.0
    %569 = vmatprep.subr.mxu0 0.0
    %570 = vmatpush1.msra.mxu0 0.0
    %571 = vmatprep.subr.mxu0 0.0
    %572 = vmatpush1.msra.mxu0 0.0
    %573 = vmatprep.subr.mxu0 0.0
    %574 = vmatpush1.msra.mxu0 0.0
    %575 = vmatprep.subr.mxu0 0.0
    %576 = vmatpush1.msra.mxu0 0.0
    %577 = vmatprep.subr.mxu0 0.0
    %578 = vmatpush1.msra.mxu0 0.0
    %579 = vmatprep.subr.mxu0 0.0
    %580 = vmatpush1.msra.mxu0 0.0
    %581 = vmatprep.subr.mxu0 0.0
    %582 = vmatpush1.msra.mxu0 0.0
    %583 = vmatprep.subr.mxu0 0.0
    %584 = vmatpush1.msra.mxu0 0.0
    %585 = vmatprep.subr.mxu0 0.0
    %586 = vmatpush1.msra.mxu0 0.0
    %587 = vmatprep.subr.mxu0 0.0
    %588 = vmatpush1.msra.mxu0 0.0
    %589 = vmatprep.subr.mxu0 0.0
    %590 = vmatpush1.msra.mxu0 0.0
    %591 = vmatprep.subr.mxu0 0.0
    %592 = vmatpush1.msra.mxu0 0.0
    %593 = vmatprep.subr.mxu0 0.0
    %594 = vmatpush1.msra.mxu0 0.0
    %595 = vmatprep.subr.mxu0 0.0
    %596 = vmatpush1.msra.mxu0 0.0
    %597 = vmatprep.subr.mxu0 0.0
    %598 = vmatpush1.msra.mxu0 0.0
    %599 = vmatprep.subr.mxu0 0.0
    %600 = vmatpush1.msra.mxu0 0.0
    %601 = vmatprep.subr.mxu0 0.0
    %602 = vmatpush1.msra.mxu0 0.0
    %603 = vmatprep.subr.mxu0 0.0
    %604 = vmatpush1.msra.mxu0 0.0
    %605 = vmatprep.subr.mxu0 0.0
    %606 = vmatpush1.msra.mxu0 0.0
    %607 = vmatprep.subr.mxu0 0.0
    %608 = vmatpush1.msra.mxu0 0.0
    %609 = vmatprep.subr.mxu0 0.0
    %610 = vmatpush1.msra.mxu0 0.0
    %611 = vmatprep.subr.mxu0 0.0
    %612 = vmatpush1.msra.mxu0 0.0
    %613 = vmatprep.subr.mxu0 0.0
    %614 = vmatpush1.msra.mxu0 0.0
    %615 = vmatprep.subr.mxu0 0.0
    %616 = vmatpush1.msra.mxu0 0.0
    %617 = vmatprep.subr.mxu0 0.0
    %618 = vmatpush1.msra.mxu0 0.0
    %619 = vmatprep.mubr.f32.mxu0 0.0
    %620 = vmatmul.mubr.f32.gmra.mrb[0].mxu0 %v553
    %v621 = vpop.f32.mrb[0].mxu0
    %v622 = vadd.f32 0.0, %v621
    %v623 = vpop.f32.mrb[0].mxu0
    %624 = vdwg.mxu0
    %v625 = vmul.f32 %v549, %v549
    %v626 = vmul.f32 %v622, %v622
    %v627 = vsel %vm292, %v625, 0.0
    %628 = vadd.xlane.f32.xlu0 %v627
    %v629 = vpop.xlane.xlu0 %628
    %v630 = vsel %vm292, %v626, 0.0
    %631 = vadd.xlane.f32.xlu0 %v630
    %v632 = vpop.xlane.xlu0 %631
    %v633 = vmul.f32 %v549, %v629
    %v634 = vmul.f32 %v622, %v632
    %v635 = vadd.f32 %v629, 1.0
    %v636 = vadd.f32 %v632, 1.0
    %v637 = vrcp.pop %v635
    %v638 = vrcp.pop %v636
    %v639 = vmul.f32 %v633, %v637
    %v640 = vmul.f32 %v634, %v638
    %v641 = vadd.f32 %v629, 1e-09
    %v642 = vadd.f32 %v632, 1e-09
    %v643 = vrsqrt.pop %v641
    %v644 = vrsqrt.pop %v642
    %v645 = vmul.f32 %v639, %v643
    %v646 = vmul.f32 %v640, %v644
    %v647 = vld [vmem:[#allocation2] sm:$0xff]
    %v648 = vld [vmem:[#allocation2 + $0x8] sm:$0xff]
    %649 = vmatprep.subr.mxu0 0.0
    %650 = vmatpush1.xpose.msra.mxu0 %v647
    %651 = vmatprep.subr.mxu0 0.0
    %652 = vmatpush1.xpose.msra.mxu0 0.0
    %653 = vmatprep.subr.mxu0 0.0
    %654 = vmatpush1.xpose.msra.mxu0 0.0
    %655 = vmatprep.subr.mxu0 0.0
    %656 = vmatpush1.xpose.msra.mxu0 0.0
    %657 = vmatprep.subr.mxu0 0.0
    %658 = vmatpush1.xpose.msra.mxu0 0.0
    %659 = vmatprep.subr.mxu0 0.0
    %660 = vmatpush1.xpose.msra.mxu0 0.0
    %661 = vmatprep.subr.mxu0 0.0
    %662 = vmatpush1.xpose.msra.mxu0 0.0
    %663 = vmatprep.subr.mxu0 0.0
    %664 = vmatpush1.xpose.msra.mxu0 0.0
    %665 = vmatprep.subr.mxu0 0.0
    %666 = vmatpush1.xpose.msra.mxu0 0.0
    %667 = vmatprep.subr.mxu0 0.0
    %668 = vmatpush1.xpose.msra.mxu0 0.0
    %669 = vmatprep.subr.mxu0 0.0
    %670 = vmatpush1.xpose.msra.mxu0 0.0
    %671 = vmatprep.subr.mxu0 0.0
    %672 = vmatpush1.xpose.msra.mxu0 0.0
    %673 = vmatprep.subr.mxu0 0.0
    %674 = vmatpush1.xpose.msra.mxu0 0.0
    %675 = vmatprep.subr.mxu0 0.0
    %676 = vmatpush1.xpose.msra.mxu0 0.0
    %677 = vmatprep.subr.mxu0 0.0
    %678 = vmatpush1.xpose.msra.mxu0 0.0
    %679 = vmatprep.subr.mxu0 0.0
    %680 = vmatpush1.xpose.msra.mxu0 0.0
    %681 = vmatprep.subr.mxu0 0.0
    %682 = vmatpush1.xpose.msra.mxu0 0.0
    %683 = vmatprep.subr.mxu0 0.0
    %684 = vmatpush1.xpose.msra.mxu0 0.0
    %685 = vmatprep.subr.mxu0 0.0
    %686 = vmatpush1.xpose.msra.mxu0 0.0
    %687 = vmatprep.subr.mxu0 0.0
    %688 = vmatpush1.xpose.msra.mxu0 0.0
    %689 = vmatprep.subr.mxu0 0.0
    %690 = vmatpush1.xpose.msra.mxu0 0.0
    %691 = vmatprep.subr.mxu0 0.0
    %692 = vmatpush1.xpose.msra.mxu0 0.0
    %693 = vmatprep.subr.mxu0 0.0
    %694 = vmatpush1.xpose.msra.mxu0 0.0
    %695 = vmatprep.subr.mxu0 0.0
    %696 = vmatpush1.xpose.msra.mxu0 0.0
    %697 = vmatprep.subr.mxu0 0.0
    %698 = vmatpush1.xpose.msra.mxu0 0.0
    %699 = vmatprep.subr.mxu0 0.0
    %700 = vmatpush1.xpose.msra.mxu0 0.0
    %701 = vmatprep.subr.mxu0 0.0
    %702 = vmatpush1.xpose.msra.mxu0 0.0
    %703 = vmatprep.subr.mxu0 0.0
    %704 = vmatpush1.xpose.msra.mxu0 0.0
    %705 = vmatprep.subr.mxu0 0.0
    %706 = vmatpush1.xpose.msra.mxu0 0.0
    %707 = vmatprep.subr.mxu0 0.0
    %708 = vmatpush1.xpose.msra.mxu0 0.0
    %709 = vmatprep.subr.mxu0 0.0
    %710 = vmatpush1.xpose.msra.mxu0 0.0
    %711 = vmatprep.subr.mxu0 0.0
    %712 = vmatpush1.xpose.msra.mxu0 0.0
    %713 = vmatprep.mubr.f32.mxu0 0.0
    %714 = vmatmul.mubr.f32.gmra.mrb[0].mxu0 %v645
    %v715 = vpop.f32.mrb[0].mxu0
    %v716 = vadd.f32 0.0, %v715
    %v717 = vpop.f32.mrb[0].mxu0
    %718 = vdwg.mxu0
    %719 = vmatprep.subr.mxu0 0.0
    %720 = vmatpush1.xpose.msra.mxu0 %v648
    %721 = vmatprep.subr.mxu0 0.0
    %722 = vmatpush1.xpose.msra.mxu0 0.0
    %723 = vmatprep.subr.mxu0 0.0
    %724 = vmatpush1.xpose.msra.mxu0 0.0
    %725 = vmatprep.subr.mxu0 0.0
    %726 = vmatpush1.xpose.msra.mxu0 0.0
    %727 = vmatprep.subr.mxu0 0.0
    %728 = vmatpush1.xpose.msra.mxu0 0.0
    %729 = vmatprep.subr.mxu0 0.0
    %730 = vmatpush1.xpose.msra.mxu0 0.0
    %731 = vmatprep.subr.mxu0 0.0
    %732 = vmatpush1.xpose.msra.mxu0 0.0
    %733 = vmatprep.subr.mxu0 0.0
    %734 = vmatpush1.xpose.msra.mxu0 0.0
    %735 = vmatprep.subr.mxu0 0.0
    %736 = vmatpush1.xpose.msra.mxu0 0.0
    %737 = vmatprep.subr.mxu0 0.0
    %738 = vmatpush1.xpose.msra.mxu0 0.0
    %739 = vmatprep.subr.mxu0 0.0
    %740 = vmatpush1.xpose.msra.mxu0 0.0
    %741 = vmatprep.subr.mxu0 0.0
    %742 = vmatpush1.xpose.msra.mxu0 0.0
    %743 = vmatprep.subr.mxu0 0.0
    %744 = vmatpush1.xpose.msra.mxu0 0.0
    %745 = vmatprep.subr.mxu0 0.0
    %746 = vmatpush1.xpose.msra.mxu0 0.0
    %747 = vmatprep.subr.mxu0 0.0
    %748 = vmatpush1.xpose.msra.mxu0 0.0
    %749 = vmatprep.subr.mxu0 0.0
    %750 = vmatpush1.xpose.msra.mxu0 0.0
    %751 = vmatprep.subr.mxu0 0.0
    %752 = vmatpush1.xpose.msra.mxu0 0.0
    %753 = vmatprep.subr.mxu0 0.0
    %754 = vmatpush1.xpose.msra.mxu0 0.0
    %755 = vmatprep.subr.mxu0 0.0
    %756 = vmatpush1.xpose.msra.mxu0 0.0
    %757 = vmatprep.subr.mxu0 0.0
    %758 = vmatpush1.xpose.msra.mxu0 0.0
    %759 = vmatprep.subr.mxu0 0.0
    %760 = vmatpush1.xpose.msra.mxu0 0.0
    %761 = vmatprep.subr.mxu0 0.0
    %762 = vmatpush1.xpose.msra.mxu0 0.0
    %763 = vmatprep.subr.mxu0 0.0
    %764 = vmatpush1.xpose.msra.mxu0 0.0
    %765 = vmatprep.subr.mxu0 0.0
    %766 = vmatpush1.xpose.msra.mxu0 0.0
    %767 = vmatprep.subr.mxu0 0.0
    %768 = vmatpush1.xpose.msra.mxu0 0.0
    %769 = vmatprep.subr.mxu0 0.0
    %770 = vmatpush1.xpose.msra.mxu0 0.0
    %771 = vmatprep.subr.mxu0 0.0
    %772 = vmatpush1.xpose.msra.mxu0 0.0
    %773 = vmatprep.subr.mxu0 0.0
    %774 = vmatpush1.xpose.msra.mxu0 0.0
    %775 = vmatprep.subr.mxu0 0.0
    %776 = vmatpush1.xpose.msra.mxu0 0.0
    %777 = vmatprep.subr.mxu0 0.0
    %778 = vmatpush1.xpose.msra.mxu0 0.0
    %779 = vmatprep.subr.mxu0 0.0
    %780 = vmatpush1.xpose.msra.mxu0 0.0
    %781 = vmatprep.subr.mxu0 0.0
    %782 = vmatpush1.xpose.msra.mxu0 0.0
    %783 = vmatprep.mubr.f32.mxu0 0.0
    %784 = vmatmul.mubr.f32.gmra.mrb[0].mxu0 %v646
    %v785 = vpop.f32.mrb[0].mxu0
    %v786 = vadd.f32 0.0, %v785
    %v787 = vpop.f32.mrb[0].mxu0
    %788 = vdwg.mxu0
    %v789 = vadd.f32 %v455, %v716
    %v790 = vadd.f32 %v456, %v786
    %v791 = vsel %vm132, %v789, -inf
    %792 = vmax.xlane.f32.xlu0 %v791
    %v793 = vpop.xlane.xlu0 %792
    %v794 = vsel %vm132, %v790, -inf
    %795 = vmax.xlane.f32.xlu0 %v794
    %v796 = vpop.xlane.xlu0 %795
    %v797 = vsub.f32 %v789, %v793
    %v798 = vsub.f32 %v790, %v796
    %v799 = vmul.f32 %v797, 1.442695
    %v800 = vpow.pop %v799
    %v801 = vmul.f32 %v798, 1.442695
    %v802 = vpow.pop %v801
    %v803 = vsel %vm132, %v800, 0.0
    %804 = vadd.xlane.f32.xlu0 %v803
    %v805 = vpop.xlane.xlu0 %804
    %v806 = vsel %vm132, %v802, 0.0
    %807 = vadd.xlane.f32.xlu0 %v806
    %v808 = vpop.xlane.xlu0 %807
    %v809 = vrcp.pop %v805
    %v810 = vrcp.pop %v808
    %v811 = vmul.f32 %v800, %v809
    %v812 = vmul.f32 %v802, %v810
    %v814 = vsel %vm146, %v811, 0
    %816 = vmatprep.subr.mxu0 0.0
    %817 = vmatpush1.msra.mxu0 %v647
    %818 = vmatprep.subr.mxu0 0.0
    %819 = vmatpush1.msra.mxu0 0.0
    %820 = vmatprep.subr.mxu0 0.0
    %821 = vmatpush1.msra.mxu0 0.0
    %822 = vmatprep.subr.mxu0 0.0
    %823 = vmatpush1.msra.mxu0 0.0
    %824 = vmatprep.subr.mxu0 0.0
    %825 = vmatpush1.msra.mxu0 0.0
    %826 = vmatprep.subr.mxu0 0.0
    %827 = vmatpush1.msra.mxu0 0.0
    %828 = vmatprep.subr.mxu0 0.0
    %829 = vmatpush1.msra.mxu0 0.0
    %830 = vmatprep.subr.mxu0 0.0
    %831 = vmatpush1.msra.mxu0 0.0
    %832 = vmatprep.subr.mxu0 0.0
    %833 = vmatpush1.msra.mxu0 0.0
    %834 = vmatprep.subr.mxu0 0.0
    %835 = vmatpush1.msra.mxu0 0.0
    %836 = vmatprep.subr.mxu0 0.0
    %837 = vmatpush1.msra.mxu0 0.0
    %838 = vmatprep.subr.mxu0 0.0
    %839 = vmatpush1.msra.mxu0 0.0
    %840 = vmatprep.subr.mxu0 0.0
    %841 = vmatpush1.msra.mxu0 0.0
    %842 = vmatprep.subr.mxu0 0.0
    %843 = vmatpush1.msra.mxu0 0.0
    %844 = vmatprep.subr.mxu0 0.0
    %845 = vmatpush1.msra.mxu0 0.0
    %846 = vmatprep.subr.mxu0 0.0
    %847 = vmatpush1.msra.mxu0 0.0
    %848 = vmatprep.subr.mxu0 0.0
    %849 = vmatpush1.msra.mxu0 0.0
    %850 = vmatprep.subr.mxu0 0.0
    %851 = vmatpush1.msra.mxu0 0.0
    %852 = vmatprep.subr.mxu0 0.0
    %853 = vmatpush1.msra.mxu0 0.0
    %854 = vmatprep.subr.mxu0 0.0
    %855 = vmatpush1.msra.mxu0 0.0
    %856 = vmatprep.subr.mxu0 0.0
    %857 = vmatpush1.msra.mxu0 0.0
    %858 = vmatprep.subr.mxu0 0.0
    %859 = vmatpush1.msra.mxu0 0.0
    %860 = vmatprep.subr.mxu0 0.0
    %861 = vmatpush1.msra.mxu0 0.0
    %862 = vmatprep.subr.mxu0 0.0
    %863 = vmatpush1.msra.mxu0 0.0
    %864 = vmatprep.subr.mxu0 0.0
    %865 = vmatpush1.msra.mxu0 0.0
    %866 = vmatprep.subr.mxu0 0.0
    %867 = vmatpush1.msra.mxu0 0.0
    %868 = vmatprep.subr.mxu0 0.0
    %869 = vmatpush1.msra.mxu0 0.0
    %870 = vmatprep.subr.mxu0 0.0
    %871 = vmatpush1.msra.mxu0 0.0
    %872 = vmatprep.subr.mxu0 0.0
    %873 = vmatpush1.msra.mxu0 0.0
    %874 = vmatprep.subr.mxu0 0.0
    %875 = vmatpush1.msra.mxu0 0.0
    %876 = vmatprep.subr.mxu0 0.0
    %877 = vmatpush1.msra.mxu0 0.0
    %878 = vmatprep.subr.mxu0 0.0
    %879 = vmatpush1.msra.mxu0 0.0
    %880 = vmatprep.mubr.f32.mxu0 0.0
    %881 = vmatmul.mubr.f32.gmra.mrb[0].mxu0 %v814
    %v882 = vpop.f32.mrb[0].mxu0
    %v883 = vadd.f32 0.0, %v882
    %v884 = vpop.f32.mrb[0].mxu0
    %885 = vdwg.mxu0
    %v887 = vsel %vm146, %v812, 0
    %889 = vmatprep.subr.mxu0 0.0
    %890 = vmatpush1.msra.mxu0 %v648
    %891 = vmatprep.subr.mxu0 0.0
    %892 = vmatpush1.msra.mxu0 0.0
    %893 = vmatprep.subr.mxu0 0.0
    %894 = vmatpush1.msra.mxu0 0.0
    %895 = vmatprep.subr.mxu0 0.0
    %896 = vmatpush1.msra.mxu0 0.0
    %897 = vmatprep.subr.mxu0 0.0
    %898 = vmatpush1.msra.mxu0 0.0
    %899 = vmatprep.subr.mxu0 0.0
    %900 = vmatpush1.msra.mxu0 0.0
    %901 = vmatprep.subr.mxu0 0.0
    %902 = vmatpush1.msra.mxu0 0.0
    %903 = vmatprep.subr.mxu0 0.0
    %904 = vmatpush1.msra.mxu0 0.0
    %905 = vmatprep.subr.mxu0 0.0
    %906 = vmatpush1.msra.mxu0 0.0
    %907 = vmatprep.subr.mxu0 0.0
    %908 = vmatpush1.msra.mxu0 0.0
    %909 = vmatprep.subr.mxu0 0.0
    %910 = vmatpush1.msra.mxu0 0.0
    %911 = vmatprep.subr.mxu0 0.0
    %912 = vmatpush1.msra.mxu0 0.0
    %913 = vmatprep.subr.mxu0 0.0
    %914 = vmatpush1.msra.mxu0 0.0
    %915 = vmatprep.subr.mxu0 0.0
    %916 = vmatpush1.msra.mxu0 0.0
    %917 = vmatprep.subr.mxu0 0.0
    %918 = vmatpush1.msra.mxu0 0.0
    %919 = vmatprep.subr.mxu0 0.0
    %920 = vmatpush1.msra.mxu0 0.0
    %921 = vmatprep.subr.mxu0 0.0
    %922 = vmatpush1.msra.mxu0 0.0
    %923 = vmatprep.subr.mxu0 0.0
    %924 = vmatpush1.msra.mxu0 0.0
    %925 = vmatprep.subr.mxu0 0.0
    %926 = vmatpush1.msra.mxu0 0.0
    %927 = vmatprep.subr.mxu0 0.0
    %928 = vmatpush1.msra.mxu0 0.0
    %929 = vmatprep.subr.mxu0 0.0
    %930 = vmatpush1.msra.mxu0 0.0
    %931 = vmatprep.subr.mxu0 0.0
    %932 = vmatpush1.msra.mxu0 0.0
    %933 = vmatprep.subr.mxu0 0.0
    %934 = vmatpush1.msra.mxu0 0.0
    %935 = vmatprep.subr.mxu0 0.0
    %936 = vmatpush1.msra.mxu0 0.0
    %937 = vmatprep.subr.mxu0 0.0
    %938 = vmatpush1.msra.mxu0 0.0
    %939 = vmatprep.subr.mxu0 0.0
    %940 = vmatpush1.msra.mxu0 0.0
    %941 = vmatprep.subr.mxu0 0.0
    %942 = vmatpush1.msra.mxu0 0.0
    %943 = vmatprep.subr.mxu0 0.0
    %944 = vmatpush1.msra.mxu0 0.0
    %945 = vmatprep.subr.mxu0 0.0
    %946 = vmatpush1.msra.mxu0 0.0
    %947 = vmatprep.subr.mxu0 0.0
    %948 = vmatpush1.msra.mxu0 0.0
    %949 = vmatprep.subr.mxu0 0.0
    %950 = vmatpush1.msra.mxu0 0.0
    %951 = vmatprep.subr.mxu0 0.0
    %952 = vmatpush1.msra.mxu0 0.0
    %953 = vmatprep.mubr.f32.mxu0 0.0
    %954 = vmatmul.mubr.f32.gmra.mrb[0].mxu0 %v887
    %v955 = vpop.f32.mrb[0].mxu0
    %v956 = vadd.f32 0.0, %v955
    %v957 = vpop.f32.mrb[0].mxu0
    %958 = vdwg.mxu0
    %v959 = vmul.f32 %v883, %v883
    %v960 = vmul.f32 %v956, %v956
    %v961 = vsel %vm292, %v959, 0.0
    %962 = vadd.xlane.f32.xlu0 %v961
    %v963 = vpop.xlane.xlu0 %962
    %v964 = vsel %vm292, %v960, 0.0
    %965 = vadd.xlane.f32.xlu0 %v964
    %v966 = vpop.xlane.xlu0 %965
    %v967 = vmul.f32 %v883, %v963
    %v968 = vmul.f32 %v956, %v966
    %v969 = vadd.f32 %v963, 1.0
    %v970 = vadd.f32 %v966, 1.0
    %v971 = vrcp.pop %v969
    %v972 = vrcp.pop %v970
    %v973 = vmul.f32 %v967, %v971
    %v974 = vmul.f32 %v968, %v972
    %v975 = vadd.f32 %v963, 1e-09
    %v976 = vadd.f32 %v966, 1e-09
    %v977 = vrsqrt.pop %v975
    %v978 = vrsqrt.pop %v976
    %v979 = vmul.f32 %v973, %v977
    %v980 = vmul.f32 %v974, %v978
    %v981 = vld [vmem:[#allocation2] sm:$0xff]
    %v982 = vld [vmem:[#allocation2 + $0x8] sm:$0xff]
    %983 = vmatprep.subr.mxu0 0.0
    %984 = vmatpush1.xpose.msra.mxu0 %v981
    %985 = vmatprep.subr.mxu0 0.0
    %986 = vmatpush1.xpose.msra.mxu0 0.0
    %987 = vmatprep.subr.mxu0 0.0
    %988 = vmatpush1.xpose.msra.mxu0 0.0
    %989 = vmatprep.subr.mxu0 0.0
    %990 = vmatpush1.xpose.msra.mxu0 0.0
    %991 = vmatprep.subr.mxu0 0.0
    %992 = vmatpush1.xpose.msra.mxu0 0.0
    %993 = vmatprep.subr.mxu0 0.0
    %994 = vmatpush1.xpose.msra.mxu0 0.0
    %995 = vmatprep.subr.mxu0 0.0
    %996 = vmatpush1.xpose.msra.mxu0 0.0
    %997 = vmatprep.subr.mxu0 0.0
    %998 = vmatpush1.xpose.msra.mxu0 0.0
    %999 = vmatprep.subr.mxu0 0.0
    %1000 = vmatpush1.xpose.msra.mxu0 0.0
    %1001 = vmatprep.subr.mxu0 0.0
    %1002 = vmatpush1.xpose.msra.mxu0 0.0
    %1003 = vmatprep.subr.mxu0 0.0
    %1004 = vmatpush1.xpose.msra.mxu0 0.0
    %1005 = vmatprep.subr.mxu0 0.0
    %1006 = vmatpush1.xpose.msra.mxu0 0.0
    %1007 = vmatprep.subr.mxu0 0.0
    %1008 = vmatpush1.xpose.msra.mxu0 0.0
    %1009 = vmatprep.subr.mxu0 0.0
    %1010 = vmatpush1.xpose.msra.mxu0 0.0
    %1011 = vmatprep.subr.mxu0 0.0
    %1012 = vmatpush1.xpose.msra.mxu0 0.0
    %1013 = vmatprep.subr.mxu0 0.0
    %1014 = vmatpush1.xpose.msra.mxu0 0.0
    %1015 = vmatprep.subr.mxu0 0.0
    %1016 = vmatpush1.xpose.msra.mxu0 0.0
    %1017 = vmatprep.subr.mxu0 0.0
    %1018 = vmatpush1.xpose.msra.mxu0 0.0
    %1019 = vmatprep.subr.mxu0 0.0
    %1020 = vmatpush1.xpose.msra.mxu0 0.0
    %1021 = vmatprep.subr.mxu0 0.0
    %1022 = vmatpush1.xpose.msra.mxu0 0.0
    %1023 = vmatprep.subr.mxu0 0.0
    %1024 = vmatpush1.xpose.msra.mxu0 0.0
    %1025 = vmatprep.subr.mxu0 0.0
    %1026 = vmatpush1.xpose.msra.mxu0 0.0
    %1027 = vmatprep.subr.mxu0 0.0
    %1028 = vmatpush1.xpose.msra.mxu0 0.0
    %1029 = vmatprep.subr.mxu0 0.0
    %1030 = vmatpush1.xpose.msra.mxu0 0.0
    %1031 = vmatprep.subr.mxu0 0.0
    %1032 = vmatpush1.xpose.msra.mxu0 0.0
    %1033 = vmatprep.subr.mxu0 0.0
    %1034 = vmatpush1.xpose.msra.mxu0 0.0
    %1035 = vmatprep.subr.mxu0 0.0
    %1036 = vmatpush1.xpose.msra.mxu0 0.0
    %1037 = vmatprep.subr.mxu0 0.0
    %1038 = vmatpush1.xpose.msra.mxu0 0.0
    %1039 = vmatprep.subr.mxu0 0.0
    %1040 = vmatpush1.xpose.msra.mxu0 0.0
    %1041 = vmatprep.subr.mxu0 0.0
    %1042 = vmatpush1.xpose.msra.mxu0 0.0
    %1043 = vmatprep.subr.mxu0 0.0
    %1044 = vmatpush1.xpose.msra.mxu0 0.0
    %1045 = vmatprep.subr.mxu0 0.0
    %1046 = vmatpush1.xpose.msra.mxu0 0.0
    %1047 = vmatprep.mubr.f32.mxu0 0.0
    %1048 = vmatmul.mubr.f32.gmra.mrb[0].mxu0 %v979
    %v1049 = vpop.f32.mrb[0].mxu0
    %v1050 = vadd.f32 0.0, %v1049
    %v1051 = vpop.f32.mrb[0].mxu0
    %1052 = vdwg.mxu0
    %1053 = vmatprep.subr.mxu0 0.0
    %1054 = vmatpush1.xpose.msra.mxu0 %v982
    %1055 = vmatprep.subr.mxu0 0.0
    %1056 = vmatpush1.xpose.msra.mxu0 0.0
    %1057 = vmatprep.subr.mxu0 0.0
    %1058 = vmatpush1.xpose.msra.mxu0 0.0
    %1059 = vmatprep.subr.mxu0 0.0
    %1060 = vmatpush1.xpose.msra.mxu0 0.0
    %1061 = vmatprep.subr.mxu0 0.0
    %1062 = vmatpush1.xpose.msra.mxu0 0.0
    %1063 = vmatprep.subr.mxu0 0.0
    %1064 = vmatpush1.xpose.msra.mxu0 0.0
    %1065 = vmatprep.subr.mxu0 0.0
    %1066 = vmatpush1.xpose.msra.mxu0 0.0
    %1067 = vmatprep.subr.mxu0 0.0
    %1068 = vmatpush1.xpose.msra.mxu0 0.0
    %1069 = vmatprep.subr.mxu0 0.0
    %1070 = vmatpush1.xpose.msra.mxu0 0.0
    %1071 = vmatprep.subr.mxu0 0.0
    %1072 = vmatpush1.xpose.msra.mxu0 0.0
    %1073 = vmatprep.subr.mxu0 0.0
    %1074 = vmatpush1.xpose.msra.mxu0 0.0
    %1075 = vmatprep.subr.mxu0 0.0
    %1076 = vmatpush1.xpose.msra.mxu0 0.0
    %1077 = vmatprep.subr.mxu0 0.0
    %1078 = vmatpush1.xpose.msra.mxu0 0.0
    %1079 = vmatprep.subr.mxu0 0.0
    %1080 = vmatpush1.xpose.msra.mxu0 0.0
    %1081 = vmatprep.subr.mxu0 0.0
    %1082 = vmatpush1.xpose.msra.mxu0 0.0
    %1083 = vmatprep.subr.mxu0 0.0
    %1084 = vmatpush1.xpose.msra.mxu0 0.0
    %1085 = vmatprep.subr.mxu0 0.0
    %1086 = vmatpush1.xpose.msra.mxu0 0.0
    %1087 = vmatprep.subr.mxu0 0.0
    %1088 = vmatpush1.xpose.msra.mxu0 0.0
    %1089 = vmatprep.subr.mxu0 0.0
    %1090 = vmatpush1.xpose.msra.mxu0 0.0
    %1091 = vmatprep.subr.mxu0 0.0
    %1092 = vmatpush1.xpose.msra.mxu0 0.0
    %1093 = vmatprep.subr.mxu0 0.0
    %1094 = vmatpush1.xpose.msra.mxu0 0.0
    %1095 = vmatprep.subr.mxu0 0.0
    %1096 = vmatpush1.xpose.msra.mxu0 0.0
    %1097 = vmatprep.subr.mxu0 0.0
    %1098 = vmatpush1.xpose.msra.mxu0 0.0
    %1099 = vmatprep.subr.mxu0 0.0
    %1100 = vmatpush1.xpose.msra.mxu0 0.0
    %1101 = vmatprep.subr.mxu0 0.0
    %1102 = vmatpush1.xpose.msra.mxu0 0.0
    %1103 = vmatprep.subr.mxu0 0.0
    %1104 = vmatpush1.xpose.msra.mxu0 0.0
    %1105 = vmatprep.subr.mxu0 0.0
    %1106 = vmatpush1.xpose.msra.mxu0 0.0
    %1107 = vmatprep.subr.mxu0 0.0
    %1108 = vmatpush1.xpose.msra.mxu0 0.0
    %1109 = vmatprep.subr.mxu0 0.0
    %1110 = vmatpush1.xpose.msra.mxu0 0.0
    %1111 = vmatprep.subr.mxu0 0.0
    %1112 = vmatpush1.xpose.msra.mxu0 0.0
    %1113 = vmatprep.subr.mxu0 0.0
    %1114 = vmatpush1.xpose.msra.mxu0 0.0
    %1115 = vmatprep.subr.mxu0 0.0
    %1116 = vmatpush1.xpose.msra.mxu0 0.0
    %1117 = vmatprep.mubr.f32.mxu0 0.0
    %1118 = vmatmul.mubr.f32.gmra.mrb[0].mxu0 %v980
    %v1119 = vpop.f32.mrb[0].mxu0
    %v1120 = vadd.f32 0.0, %v1119
    %v1121 = vpop.f32.mrb[0].mxu0
    %1122 = vdwg.mxu0
    %v1123 = vadd.f32 %v789, %v1050
    %v1124 = vadd.f32 %v790, %v1120
    %v1125 = vsel %vm132, %v1123, -inf
    %1126 = vmax.xlane.f32.xlu0 %v1125
    %v1127 = vpop.xlane.xlu0 %1126
    %v1128 = vsel %vm132, %v1124, -inf
    %1129 = vmax.xlane.f32.xlu0 %v1128
    %v1130 = vpop.xlane.xlu0 %1129
    %v1131 = vsub.f32 %v1123, %v1127
    %v1132 = vsub.f32 %v1124, %v1130
    %v1133 = vmul.f32 %v1131, 1.442695
    %v1134 = vpow.pop %v1133
    %v1135 = vmul.f32 %v1132, 1.442695
    %v1136 = vpow.pop %v1135
    %v1137 = vsel %vm132, %v1134, 0.0
    %1138 = vadd.xlane.f32.xlu0 %v1137
    %v1139 = vpop.xlane.xlu0 %1138
    %v1140 = vsel %vm132, %v1136, 0.0
    %1141 = vadd.xlane.f32.xlu0 %v1140
    %v1142 = vpop.xlane.xlu0 %1141
    %v1143 = vrcp.pop %v1139
    %v1144 = vrcp.pop %v1142
    %v1145 = vmul.f32 %v1134, %v1143
    %v1146 = vmul.f32 %v1136, %v1144
    %v1148 = vsel %vm146, %v1145, 0
    %1150 = vmatprep.subr.mxu0 0.0
    %1151 = vmatpush1.msra.mxu0 %v981
    %1152 = vmatprep.subr.mxu0 0.0
    %1153 = vmatpush1.msra.mxu0 0.0
    %1154 = vmatprep.subr.mxu0 0.0
    %1155 = vmatpush1.msra.mxu0 0.0
    %1156 = vmatprep.subr.mxu0 0.0
    %1157 = vmatpush1.msra.mxu0 0.0
    %1158 = vmatprep.subr.mxu0 0.0
    %1159 = vmatpush1.msra.mxu0 0.0
    %1160 = vmatprep.subr.mxu0 0.0
    %1161 = vmatpush1.msra.mxu0 0.0
    %1162 = vmatprep.subr.mxu0 0.0
    %1163 = vmatpush1.msra.mxu0 0.0
    %1164 = vmatprep.subr.mxu0 0.0
    %1165 = vmatpush1.msra.mxu0 0.0
    %1166 = vmatprep.subr.mxu0 0.0
    %1167 = vmatpush1.msra.mxu0 0.0
    %1168 = vmatprep.subr.mxu0 0.0
    %1169 = vmatpush1.msra.mxu0 0.0
    %1170 = vmatprep.subr.mxu0 0.0
    %1171 = vmatpush1.msra.mxu0 0.0
    %1172 = vmatprep.subr.mxu0 0.0
    %1173 = vmatpush1.msra.mxu0 0.0
    %1174 = vmatprep.subr.mxu0 0.0
    %1175 = vmatpush1.msra.mxu0 0.0
    %1176 = vmatprep.subr.mxu0 0.0
    %1177 = vmatpush1.msra.mxu0 0.0
    %1178 = vmatprep.subr.mxu0 0.0
    %1179 = vmatpush1.msra.mxu0 0.0
    %1180 = vmatprep.subr.mxu0 0.0
    %1181 = vmatpush1.msra.mxu0 0.0
    %1182 = vmatprep.subr.mxu0 0.0
    %1183 = vmatpush1.msra.mxu0 0.0
    %1184 = vmatprep.subr.mxu0 0.0
    %1185 = vmatpush1.msra.mxu0 0.0
    %1186 = vmatprep.subr.mxu0 0.0
    %1187 = vmatpush1.msra.mxu0 0.0
    %1188 = vmatprep.subr.mxu0 0.0
    %1189 = vmatpush1.msra.mxu0 0.0
    %1190 = vmatprep.subr.mxu0 0.0
    %1191 = vmatpush1.msra.mxu0 0.0
    %1192 = vmatprep.subr.mxu0 0.0
    %1193 = vmatpush1.msra.mxu0 0.0
    %1194 = vmatprep.subr.mxu0 0.0
    %1195 = vmatpush1.msra.mxu0 0.0
    %1196 = vmatprep.subr.mxu0 0.0
    %1197 = vmatpush1.msra.mxu0 0.0
    %1198 = vmatprep.subr.mxu0 0.0
    %1199 = vmatpush1.msra.mxu0 0.0
    %1200 = vmatprep.subr.mxu0 0.0
    %1201 = vmatpush1.msra.mxu0 0.0
    %1202 = vmatprep.subr.mxu0 0.0
    %1203 = vmatpush1.msra.mxu0 0.0
    %1204 = vmatprep.subr.mxu0 0.0
    %1205 = vmatpush1.msra.mxu0 0.0
    %1206 = vmatprep.subr.mxu0 0.0
    %1207 = vmatpush1.msra.mxu0 0.0
    %1208 = vmatprep.subr.mxu0 0.0
    %1209 = vmatpush1.msra.mxu0 0.0
    %1210 = vmatprep.subr.mxu0 0.0
    %1211 = vmatpush1.msra.mxu0 0.0
    %1212 = vmatprep.subr.mxu0 0.0
    %1213 = vmatpush1.msra.mxu0 0.0
    %1214 = vmatprep.mubr.f32.mxu0 0.0
    %1215 = vmatmul.mubr.f32.gmra.mrb[0].mxu0 %v1148
    %v1216 = vpop.f32.mrb[0].mxu0
    %v1217 = vadd.f32 0.0, %v1216
    %v1218 = vpop.f32.mrb[0].mxu0
    %1219 = vdwg.mxu0
    %v1221 = vsel %vm146, %v1146, 0
    %1223 = vmatprep.subr.mxu0 0.0
    %1224 = vmatpush1.msra.mxu0 %v982
    %1225 = vmatprep.subr.mxu0 0.0
    %1226 = vmatpush1.msra.mxu0 0.0
    %1227 = vmatprep.subr.mxu0 0.0
    %1228 = vmatpush1.msra.mxu0 0.0
    %1229 = vmatprep.subr.mxu0 0.0
    %1230 = vmatpush1.msra.mxu0 0.0
    %1231 = vmatprep.subr.mxu0 0.0
    %1232 = vmatpush1.msra.mxu0 0.0
    %1233 = vmatprep.subr.mxu0 0.0
    %1234 = vmatpush1.msra.mxu0 0.0
    %1235 = vmatprep.subr.mxu0 0.0
    %1236 = vmatpush1.msra.mxu0 0.0
    %1237 = vmatprep.subr.mxu0 0.0
    %1238 = vmatpush1.msra.mxu0 0.0
    %1239 = vmatprep.subr.mxu0 0.0
    %1240 = vmatpush1.msra.mxu0 0.0
    %1241 = vmatprep.subr.mxu0 0.0
    %1242 = vmatpush1.msra.mxu0 0.0
    %1243 = vmatprep.subr.mxu0 0.0
    %1244 = vmatpush1.msra.mxu0 0.0
    %1245 = vmatprep.subr.mxu0 0.0
    %1246 = vmatpush1.msra.mxu0 0.0
    %1247 = vmatprep.subr.mxu0 0.0
    %1248 = vmatpush1.msra.mxu0 0.0
    %1249 = vmatprep.subr.mxu0 0.0
    %1250 = vmatpush1.msra.mxu0 0.0
    %1251 = vmatprep.subr.mxu0 0.0
    %1252 = vmatpush1.msra.mxu0 0.0
    %1253 = vmatprep.subr.mxu0 0.0
    %1254 = vmatpush1.msra.mxu0 0.0
    %1255 = vmatprep.subr.mxu0 0.0
    %1256 = vmatpush1.msra.mxu0 0.0
    %1257 = vmatprep.subr.mxu0 0.0
    %1258 = vmatpush1.msra.mxu0 0.0
    %1259 = vmatprep.subr.mxu0 0.0
    %1260 = vmatpush1.msra.mxu0 0.0
    %1261 = vmatprep.subr.mxu0 0.0
    %1262 = vmatpush1.msra.mxu0 0.0
    %1263 = vmatprep.subr.mxu0 0.0
    %1264 = vmatpush1.msra.mxu0 0.0
    %1265 = vmatprep.subr.mxu0 0.0
    %1266 = vmatpush1.msra.mxu0 0.0
    %1267 = vmatprep.subr.mxu0 0.0
    %1268 = vmatpush1.msra.mxu0 0.0
    %1269 = vmatprep.subr.mxu0 0.0
    %1270 = vmatpush1.msra.mxu0 0.0
    %1271 = vmatprep.subr.mxu0 0.0
    %1272 = vmatpush1.msra.mxu0 0.0
    %1273 = vmatprep.subr.mxu0 0.0
    %1274 = vmatpush1.msra.mxu0 0.0
    %1275 = vmatprep.subr.mxu0 0.0
    %1276 = vmatpush1.msra.mxu0 0.0
    %1277 = vmatprep.subr.mxu0 0.0
    %1278 = vmatpush1.msra.mxu0 0.0
    %1279 = vmatprep.subr.mxu0 0.0
    %1280 = vmatpush1.msra.mxu0 0.0
    %1281 = vmatprep.subr.mxu0 0.0
    %1282 = vmatpush1.msra.mxu0 0.0
    %1283 = vmatprep.subr.mxu0 0.0
    %1284 = vmatpush1.msra.mxu0 0.0
    %1285 = vmatprep.subr.mxu0 0.0
    %1286 = vmatpush1.msra.mxu0 0.0
    %1287 = vmatprep.mubr.f32.mxu0 0.0
    %1288 = vmatmul.mubr.f32.gmra.mrb[0].mxu0 %v1221
    %v1289 = vpop.f32.mrb[0].mxu0
    %v1290 = vadd.f32 0.0, %v1289
    %v1291 = vpop.f32.mrb[0].mxu0
    %1292 = vdwg.mxu0
    %v1293 = vmul.f32 %v1217, %v1217
    %v1294 = vmul.f32 %v1290, %v1290
    %v1295 = vsel %vm292, %v1293, 0.0
    %1296 = vadd.xlane.f32.xlu0 %v1295
    %v1297 = vpop.xlane.xlu0 %1296
    %v1298 = vsel %vm292, %v1294, 0.0
    %1299 = vadd.xlane.f32.xlu0 %v1298
    %v1300 = vpop.xlane.xlu0 %1299
    %v1301 = vmul.f32 %v1217, %v1297
    %v1302 = vmul.f32 %v1290, %v1300
    %v1303 = vadd.f32 %v1297, 1.0
    %v1304 = vadd.f32 %v1300, 1.0
    %v1305 = vrcp.pop %v1303
    %v1306 = vrcp.pop %v1304
    %v1307 = vmul.f32 %v1301, %v1305
    %v1308 = vmul.f32 %v1302, %v1306
    %v1309 = vadd.f32 %v1297, 1e-09
    %v1310 = vadd.f32 %v1300, 1e-09
    %v1311 = vrsqrt.pop %v1309
    %v1312 = vrsqrt.pop %v1310
    %v1313 = vmul.f32 %v1307, %v1311
    %v1314 = vmul.f32 %v1308, %v1312
    %v1317 = vrot.slane %v1314, 7
    %vm1318 = vcmask 1041409
    %v1319 = vsel %vm1318, %v1317, %v1313
    %1321 = vst [vmem:[#allocation8] sm:$0x3] %v1319
    // Predicated region
    $region22: #{tpu_custom_call.1} parent=1 // pred_check
      _
    $region23: #{tpu_custom_call.1} parent=1 // pred_check_branch
      %1323 = sbr.rel (0) target = $region25
    $region24: #{tpu_custom_call.1} parent=1 // pred_region
      %s1325 = ssub.s32 32, 32
      %1326 = vsyncadd [#allocation5], %s1325
      %s1328 = sshll.u32 [#allocation8], 4
      %s1329 = int_to_ptr.vmem [resolvable:$true] %s1328
      %1331 = dma.vmem_to_hbm [thread:$0]  %s1329, 32, %s3, [#allocation5]
    $region25: #{tpu_custom_call.1} parent=1 // pred_fallthru
      _
    // Predicated region
    $region26: #{tpu_custom_call.1} parent=1 // pred_check
      _
    $region27: #{tpu_custom_call.1} parent=1 // pred_check_branch
      %1333 = sbr.rel (0) target = $region29
    $region28: #{tpu_custom_call.1} parent=1 // pred_region
      %1334 = dma.done [#allocation5], 32
    $region29: #{tpu_custom_call.1} parent=1 // pred_fallthru
      _
    %1335 = vsyncpa [#allocation4], 1
    %1336 = vsyncpa [#allocation7], 1
    %1337 = vsyncpa [#allocation5], 1

</llo_original>
